<compile_context>
chip_gen: v5e
topology: v5e:2x2
jax: 0.10.0
libtpu: 0.0.40
codegen_flags: <defaults>
</compile_context>

<pallas_src>
import math

import jax
import jax.numpy as jnp
from jax import lax
from jax.experimental import pallas as pl


# ----------------------------- config (small) -----------------------------
B = 2          # batch
T = 8          # sequence length (== block_size here)
C = 32         # n_embd
H = 2          # n_head
D = C // H     # head dim
V = 256        # vocab size (small, lane-aligned)
N_LAYER = 2
EPS = 1e-5
NEG_INF = -1e30               # finite mask value (avoids NaN from -inf rows)
MATMUL_DTYPE = jnp.bfloat16   # MXU-native on v5e/v6e/v7x; accumulate in f32
APPROX_SOFTMAX_RECIP = True   # EUP vrcp; intentional tiny deviation from exact softmax


# ----------------------------- kernel helpers -----------------------------
def _layernorm(x, w, b):
    # x: (R, C) f32; w, b: (1, C) f32
    mu = jnp.mean(x, axis=-1, keepdims=True)
    xc = x - mu
    var = jnp.mean(xc * xc, axis=-1, keepdims=True)
    return xc * lax.rsqrt(var + EPS) * w + b


def _gelu_tanh(x):
    # GELU(approximate='tanh'), f32 on the VPU/EUP
    c = math.sqrt(2.0 / math.pi)
    return 0.5 * x * (1.0 + jnp.tanh(c * (x + 0.044715 * x * x * x)))


def _softmax_rows(s):
    s = s - jnp.max(s, axis=-1, keepdims=True)
    p = jnp.exp(s)
    denom = jnp.sum(p, axis=-1, keepdims=True)
    if APPROX_SOFTMAX_RECIP:
        return p * pl.reciprocal(denom, approx=True)
    return p / denom


# --------------------- fused GPT kernel (grid-less) ---------------------
def gpt_kernel(x_emb_ref,
               ln1w, ln1b, wqkv, bqkv, wpr, bpr,
               ln2w, ln2b, wfc, bfc, wpr2, bpr2,
               lnfw, lnfb, wte_t,
               logits_ref):
    f32 = jnp.float32
    x = x_emb_ref[...]                                    # (B*T, C) f32 residual

    # (T, T) additive causal bias built in-register (no HBM input needed).
    row = lax.broadcasted_iota(jnp.int32, (T, T), 0)
    col = lax.broadcasted_iota(jnp.int32, (T, T), 1)
    causal_bias = jnp.where(col <= row, f32(0.0), f32(NEG_INF))
    scale = f32(1.0 / math.sqrt(D))

    for l in range(N_LAYER):                              # static unroll
        # ---- ln_1 + causal self-attention ----
        h = _layernorm(x, ln1w[l], ln1b[l])
        qkv = jnp.dot(h.astype(MATMUL_DTYPE), wqkv[l],
                      preferred_element_type=f32) + bqkv[l]      # (B*T, 3C) f32
        w_proj = wpr[l]                                   # (C, C) bf16

        y_chunks = []
        for b in range(B):                                # per-batch (T,T) scores
            r0 = b * T
            y_b = jnp.zeros((T, C), f32)
            for hh in range(H):                           # static unroll (H small)
                lo, hi = hh * D, (hh + 1) * D
                qh = qkv[r0:r0 + T, lo:hi].astype(MATMUL_DTYPE)              # (T, D)
                kh = qkv[r0:r0 + T, C + lo:C + hi].astype(MATMUL_DTYPE)
                vh = qkv[r0:r0 + T, 2 * C + lo:2 * C + hi].astype(MATMUL_DTYPE)
                # q @ k.T without materializing a transpose
                s = lax.dot_general(qh, kh, (((1,), (1,)), ((), ())),
                                    preferred_element_type=f32)
                s = s * scale + causal_bias               # (T, T) f32
                p = _softmax_rows(s)
                o = jnp.dot(p.astype(MATMUL_DTYPE), vh, preferred_element_type=f32)
                # Accumulate this head straight through its row-slice of c_proj:
                # no sub-128-lane scratch store, no re-load.
                y_b = y_b + jnp.dot(o.astype(MATMUL_DTYPE), w_proj[lo:hi, :],
                                    preferred_element_type=f32)
            y_chunks.append(y_b)
        y = jnp.concatenate(y_chunks, axis=0) + bpr[l]    # (B*T, C) f32
        x = x + y

        # ---- ln_2 + MLP ----
        h2 = _layernorm(x, ln2w[l], ln2b[l])
        f = jnp.dot(h2.astype(MATMUL_DTYPE), wfc[l],
                    preferred_element_type=f32) + bfc[l]  # (B*T, 4C) f32
        g = _gelu_tanh(f)
        x = x + jnp.dot(g.astype(MATMUL_DTYPE), wpr2[l],
                        preferred_element_type=f32) + bpr2[l]

    # ---- final layernorm + lm_head (only lane-dense V=256 written to HBM) ----
    hf = _layernorm(x, lnfw[...], lnfb[...])
    logits_ref[...] = jnp.dot(hf.astype(MATMUL_DTYPE), wte_t[...],
                              preferred_element_type=f32)


def gpt_pallas_call(x_flat, p):
    # Grid-less call: every input is a single whole-array VMEM block.
    return pl.pallas_call(
        gpt_kernel,
        out_shape=jax.ShapeDtypeStruct((B * T, V), jnp.float32),
    )(x_flat,
      p["ln1_w"], p["ln1_b"], p["w_qkv"], p["b_qkv"],
      p["w_attn_proj"], p["b_attn_proj"],
      p["ln2_w"], p["ln2_b"], p["w_fc"], p["b_fc"],
      p["w_mlp_proj"], p["b_mlp_proj"],
      p["lnf_w"], p["lnf_b"], p["wte_t"])


# ----------------------------- parameter init -----------------------------
def init_params(key):
    std = 0.02
    std_scaled = 0.02 * (2 * N_LAYER) ** (-0.5)            # NANOGPT_SCALE_INIT
    L = N_LAYER
    bf = MATMUL_DTYPE
    k = jax.random.split(key, 6)
    wte = std * jax.random.normal(k[0], (V, C), jnp.float32)   # tied with lm_head
    wpe = std * jax.random.normal(k[1], (T, C), jnp.float32)   # block_size == T here
    return dict(
        wte=wte,                                  # f32 for the embedding gather
        wte_t=wte.T.astype(bf),                   # tied lm_head, pre-transposed, bf16
        wpe=wpe,
        # per-layer weights stacked along a leading layer axis, stored (in, out)
        ln1_w=jnp.ones((L, 1, C), jnp.float32),
        ln1_b=jnp.zeros((L, 1, C), jnp.float32),
        w_qkv=(std * jax.random.normal(k[2], (L, C, 3 * C), jnp.float32)).astype(bf),
        b_qkv=jnp.zeros((L, 1, 3 * C), jnp.float32),
        w_attn_proj=(std_scaled * jax.random.normal(k[3], (L, C, C), jnp.float32)).astype(bf),
        b_attn_proj=jnp.zeros((L, 1, C), jnp.float32),
        ln2_w=jnp.ones((L, 1, C), jnp.float32),
        ln2_b=jnp.zeros((L, 1, C), jnp.float32),
        w_fc=(std * jax.random.normal(k[4], (L, C, 4 * C), jnp.float32)).astype(bf),
        b_fc=jnp.zeros((L, 1, 4 * C), jnp.float32),
        w_mlp_proj=(std_scaled * jax.random.normal(k[5], (L, 4 * C, C), jnp.float32)).astype(bf),
        b_mlp_proj=jnp.zeros((L, 1, C), jnp.float32),
        lnf_w=jnp.ones((1, C), jnp.float32),
        lnf_b=jnp.zeros((1, C), jnp.float32),
    )


# ------------------------------ forward pass ------------------------------
@jax.jit
def gpt_forward(params, idx):
    # embedding gather (plain-JAX glue; no clean Pallas equivalent at this size)
    tok_emb = jnp.take(params["wte"], idx, axis=0)        # (B, T, C)
    x = (tok_emb + params["wpe"][None, :T, :]).reshape(B * T, C)
    logits = gpt_pallas_call(x, params)                   # (B*T, V)
    return logits.reshape(B, T, V)
    # TODO(synk): cross-entropy loss path (targets != None) left to plain JAX.


# --------------------------- pure-JAX reference ---------------------------
# Mirrors the kernel's numerics: bf16 MXU operands, f32 accumulation/elementwise.
def ref_forward(params, idx):
    bf = MATMUL_DTYPE
    f32 = jnp.float32

    def ln(x, w, b):
        mu = x.mean(-1, keepdims=True)
        var = ((x - mu) ** 2).mean(-1, keepdims=True)
        return (x - mu) / jnp.sqrt(var + EPS) * w + b

    def mm(a, w):   # bf16 matmul with f32 accumulation
        return jnp.einsum("...i,io->...o", a.astype(bf), w, preferred_element_type=f32)

    tok_emb = jnp.take(params["wte"], idx, axis=0)
    x = tok_emb + params["wpe"][None, :T, :]
    causal = jnp.tril(jnp.ones((T, T), bool))
    for l in range(N_LAYER):
        h = ln(x, params["ln1_w"][l], params["ln1_b"][l])
        qkv = mm(h, params["w_qkv"][l]) + params["b_qkv"][l]
        q, k, v = jnp.split(qkv, 3, axis=-1)
        q = q.reshape(B, T, H, D).transpose(0, 2, 1, 3)
        k = k.reshape(B, T, H, D).transpose(0, 2, 1, 3)
        v = v.reshape(B, T, H, D).transpose(0, 2, 1, 3)
        s = jnp.einsum("bhtd,bhsd->bhts", q.astype(bf), k.astype(bf),
                       preferred_element_type=f32) / math.sqrt(D)
        s = jnp.where(causal, s, -jnp.inf)
        p = jax.nn.softmax(s, axis=-1)
        y = jnp.einsum("bhts,bhsd->bhtd", p.astype(bf), v.astype(bf),
                       preferred_element_type=f32)
        y = y.transpose(0, 2, 1, 3).reshape(B, T, C)
        x = x + (mm(y, params["w_attn_proj"][l]) + params["b_attn_proj"][l])
        h2 = ln(x, params["ln2_w"][l], params["ln2_b"][l])
        f = mm(h2, params["w_fc"][l]) + params["b_fc"][l]
        g = 0.5 * f * (1.0 + jnp.tanh(math.sqrt(2 / math.pi) * (f + 0.044715 * f ** 3)))
        x = x + (mm(g, params["w_mlp_proj"][l]) + params["b_mlp_proj"][l])
    x = ln(x, params["lnf_w"], params["lnf_b"])
    return mm(x, params["wte_t"])


# ----------------------------------- main -----------------------------------
if __name__ == "__main__":
    key = jax.random.PRNGKey(0)
    pkey, ikey = jax.random.split(key)
    params = init_params(pkey)
    idx = jax.random.randint(ikey, (B, T), 0, V, dtype=jnp.int32)

    logits = gpt_forward(params, idx)
    logits = jax.block_until_ready(logits)

    ref = ref_forward(params, idx)
    assert logits.shape == (B, T, V)
    max_err = float(jnp.max(jnp.abs(logits - ref)))
    # tolerance covers the EUP approx-reciprocal softmax and per-head f32
    # accumulation-order differences (bf16 matmul rounding matches the reference)
    assert jnp.allclose(logits, ref, rtol=2e-3, atol=2e-3), max_err

    print("KERNEL_OK")
</pallas_src>

<mosaic_0001>
module attributes {stable_mosaic.version = 11 : i64} {
  func.func @gpt_kernel(%arg0: memref<16x32xf32, #tpu.memory_space<vmem>>, %arg1: memref<2x1x32xf32, #tpu.memory_space<vmem>>, %arg2: memref<2x1x32xf32, #tpu.memory_space<vmem>>, %arg3: memref<2x32x96xbf16, #tpu.memory_space<vmem>>, %arg4: memref<2x1x96xf32, #tpu.memory_space<vmem>>, %arg5: memref<2x32x32xbf16, #tpu.memory_space<vmem>>, %arg6: memref<2x1x32xf32, #tpu.memory_space<vmem>>, %arg7: memref<2x1x32xf32, #tpu.memory_space<vmem>>, %arg8: memref<2x1x32xf32, #tpu.memory_space<vmem>>, %arg9: memref<2x32x128xbf16, #tpu.memory_space<vmem>>, %arg10: memref<2x1x128xf32, #tpu.memory_space<vmem>>, %arg11: memref<2x128x32xbf16, #tpu.memory_space<vmem>>, %arg12: memref<2x1x32xf32, #tpu.memory_space<vmem>>, %arg13: memref<1x32xf32, #tpu.memory_space<vmem>>, %arg14: memref<1x32xf32, #tpu.memory_space<vmem>>, %arg15: memref<32x256xbf16, #tpu.memory_space<vmem>>, %arg16: memref<16x256xf32, #tpu.memory_space<vmem>>) attributes {dimension_semantics = [], scalar_prefetch = 0 : i64, scratch_operands = 0 : i64, tpu.core_type = #tpu.core_type<tc>} {
    %c0 = arith.constant 0 : index
    %c0_0 = arith.constant 0 : index
    %0 = vector.load %arg0[%c0, %c0_0] : memref<16x32xf32, #tpu.memory_space<vmem>>, vector<16x32xf32>
    %1 = tpu.iota {dimensions = array<i32: 0>} : vector<8x8xi32>
    %2 = tpu.iota {dimensions = array<i32: 1>} : vector<8x8xi32>
    %3 = arith.cmpi sle, %2, %1 : vector<8x8xi32>
    %cst = arith.constant 0.000000e+00 : f32
    %cst_1 = arith.constant -1.000000e+30 : f32
    %4 = vector.broadcast %cst : f32 to vector<8x8xf32>
    %5 = vector.broadcast %cst_1 : f32 to vector<8x8xf32>
    %6 = arith.select %3, %4, %5 : vector<8x8xi1>, vector<8x8xf32>
    %c0_2 = arith.constant 0 : index
    %c0_3 = arith.constant 0 : index
    %c0_4 = arith.constant 0 : index
    %7 = vector.load %arg1[%c0_2, %c0_3, %c0_4] : memref<2x1x32xf32, #tpu.memory_space<vmem>>, vector<1x1x32xf32>
    %8 = vector.shape_cast %7 : vector<1x1x32xf32> to vector<1x32xf32>
    %c0_5 = arith.constant 0 : index
    %c0_6 = arith.constant 0 : index
    %c0_7 = arith.constant 0 : index
    %9 = vector.load %arg2[%c0_5, %c0_6, %c0_7] : memref<2x1x32xf32, #tpu.memory_space<vmem>>, vector<1x1x32xf32>
    %10 = vector.shape_cast %9 : vector<1x1x32xf32> to vector<1x32xf32>
    %cst_8 = arith.constant dense<0.000000e+00> : vector<16xf32>
    %11 = vector.multi_reduction <add>, %0, %cst_8 [1] : vector<16x32xf32> to vector<16xf32>
    %12 = vector.shape_cast %11 : vector<16xf32> to vector<16x1xf32>
    %cst_9 = arith.constant 3.200000e+01 : f32
    %13 = vector.broadcast %cst_9 : f32 to vector<16x1xf32>
    %14 = arith.divf %12, %13 : vector<16x1xf32>
    %15 = vector.broadcast %14 : vector<16x1xf32> to vector<16x32xf32>
    %16 = arith.subf %0, %15 : vector<16x32xf32>
    %17 = arith.mulf %16, %16 : vector<16x32xf32>
    %cst_10 = arith.constant dense<0.000000e+00> : vector<16xf32>
    %18 = vector.multi_reduction <add>, %17, %cst_10 [1] : vector<16x32xf32> to vector<16xf32>
    %19 = vector.shape_cast %18 : vector<16xf32> to vector<16x1xf32>
    %cst_11 = arith.constant 3.200000e+01 : f32
    %20 = vector.broadcast %cst_11 : f32 to vector<16x1xf32>
    %21 = arith.divf %19, %20 : vector<16x1xf32>
    %cst_12 = arith.constant 9.99999974E-6 : f32
    %22 = vector.broadcast %cst_12 : f32 to vector<16x1xf32>
    %23 = arith.addf %21, %22 : vector<16x1xf32>
    %24 = math.rsqrt %23 : vector<16x1xf32>
    %25 = vector.broadcast %24 : vector<16x1xf32> to vector<16x32xf32>
    %26 = arith.mulf %16, %25 : vector<16x32xf32>
    %27 = vector.broadcast %8 : vector<1x32xf32> to vector<16x32xf32>
    %28 = arith.mulf %26, %27 : vector<16x32xf32>
    %29 = vector.broadcast %10 : vector<1x32xf32> to vector<16x32xf32>
    %30 = arith.addf %28, %29 : vector<16x32xf32>
    %31 = arith.truncf %30 : vector<16x32xf32> to vector<16x32xbf16>
    %c0_13 = arith.constant 0 : index
    %c0_14 = arith.constant 0 : index
    %c0_15 = arith.constant 0 : index
    %32 = vector.load %arg3[%c0_13, %c0_14, %c0_15] : memref<2x32x96xbf16, #tpu.memory_space<vmem>>, vector<1x32x96xbf16>
    %33 = vector.shape_cast %32 : vector<1x32x96xbf16> to vector<32x96xbf16>
    %cst_16 = arith.constant dense<0.000000e+00> : vector<16x96xf32>
    %34 = tpu.matmul %31, %33, %cst_16 {dimension_numbers = #tpu.dot_dimension_numbers<[1], [0], [0], [1], [0, 0, 1, 1], [], []>} : vector<16x32xbf16>, vector<32x96xbf16>, vector<16x96xf32> -> vector<16x96xf32>
    %c0_17 = arith.constant 0 : index
    %c0_18 = arith.constant 0 : index
    %c0_19 = arith.constant 0 : index
    %35 = vector.load %arg4[%c0_17, %c0_18, %c0_19] : memref<2x1x96xf32, #tpu.memory_space<vmem>>, vector<1x1x96xf32>
    %36 = vector.shape_cast %35 : vector<1x1x96xf32> to vector<1x96xf32>
    %37 = vector.broadcast %36 : vector<1x96xf32> to vector<16x96xf32>
    %38 = arith.addf %34, %37 : vector<16x96xf32>
    %c0_20 = arith.constant 0 : index
    %c0_21 = arith.constant 0 : index
    %c0_22 = arith.constant 0 : index
    %39 = vector.load %arg5[%c0_20, %c0_21, %c0_22] : memref<2x32x32xbf16, #tpu.memory_space<vmem>>, vector<1x32x32xbf16>
    %40 = vector.shape_cast %39 : vector<1x32x32xbf16> to vector<32x32xbf16>
    %cst_23 = arith.constant 0.000000e+00 : f32
    %41 = vector.broadcast %cst_23 : f32 to vector<8x32xf32>
    %42 = vector.extract_strided_slice %38 {offsets = [0, 0], sizes = [8, 16], strides = [1, 1]} : vector<16x96xf32> to vector<8x16xf32>
    %43 = arith.truncf %42 : vector<8x16xf32> to vector<8x16xbf16>
    %44 = vector.extract_strided_slice %38 {offsets = [0, 32], sizes = [8, 16], strides = [1, 1]} : vector<16x96xf32> to vector<8x16xf32>
    %45 = arith.truncf %44 : vector<8x16xf32> to vector<8x16xbf16>
    %46 = vector.extract_strided_slice %38 {offsets = [0, 64], sizes = [8, 16], strides = [1, 1]} : vector<16x96xf32> to vector<8x16xf32>
    %47 = arith.truncf %46 : vector<8x16xf32> to vector<8x16xbf16>
    %cst_24 = arith.constant dense<0.000000e+00> : vector<8x8xf32>
    %48 = tpu.matmul %43, %45, %cst_24 {dimension_numbers = #tpu.dot_dimension_numbers<[1], [1], [0], [0], [0, 0, 1, 0], [], []>} : vector<8x16xbf16>, vector<8x16xbf16>, vector<8x8xf32> -> vector<8x8xf32>
    %cst_25 = arith.constant 2.500000e-01 : f32
    %49 = vector.broadcast %cst_25 : f32 to vector<8x8xf32>
    %50 = arith.mulf %48, %49 : vector<8x8xf32>
    %51 = arith.addf %50, %6 : vector<8x8xf32>
    %cst_26 = arith.constant dense<0xFF800000> : vector<8xf32>
    %52 = vector.multi_reduction <maximumf>, %51, %cst_26 [1] : vector<8x8xf32> to vector<8xf32>
    %53 = vector.shape_cast %52 : vector<8xf32> to vector<8x1xf32>
    %54 = vector.broadcast %53 : vector<8x1xf32> to vector<8x8xf32>
    %55 = arith.subf %51, %54 : vector<8x8xf32>
    %56 = math.exp %55 : vector<8x8xf32>
    %cst_27 = arith.constant dense<0.000000e+00> : vector<8xf32>
    %57 = vector.multi_reduction <add>, %56, %cst_27 [1] : vector<8x8xf32> to vector<8xf32>
    %58 = vector.shape_cast %57 : vector<8xf32> to vector<8x1xf32>
    %59 = tpu.reciprocal %58 {approx = true} : vector<8x1xf32> -> vector<8x1xf32>
    %60 = vector.broadcast %59 : vector<8x1xf32> to vector<8x8xf32>
    %61 = arith.mulf %56, %60 : vector<8x8xf32>
    %62 = arith.truncf %61 : vector<8x8xf32> to vector<8x8xbf16>
    %cst_28 = arith.constant dense<0.000000e+00> : vector<8x16xf32>
    %63 = tpu.matmul %62, %47, %cst_28 {dimension_numbers = #tpu.dot_dimension_numbers<[1], [0], [0], [1], [0, 0, 1, 1], [], []>} : vector<8x8xbf16>, vector<8x16xbf16>, vector<8x16xf32> -> vector<8x16xf32>
    %64 = arith.truncf %63 : vector<8x16xf32> to vector<8x16xbf16>
    %65 = vector.extract_strided_slice %40 {offsets = [0, 0], sizes = [16, 32], strides = [1, 1]} : vector<32x32xbf16> to vector<16x32xbf16>
    %cst_29 = arith.constant dense<0.000000e+00> : vector<8x32xf32>
    %66 = tpu.matmul %64, %65, %cst_29 {dimension_numbers = #tpu.dot_dimension_numbers<[1], [0], [0], [1], [0, 0, 1, 1], [], []>} : vector<8x16xbf16>, vector<16x32xbf16>, vector<8x32xf32> -> vector<8x32xf32>
    %67 = arith.addf %41, %66 : vector<8x32xf32>
    %68 = vector.extract_strided_slice %38 {offsets = [0, 16], sizes = [8, 16], strides = [1, 1]} : vector<16x96xf32> to vector<8x16xf32>
    %69 = arith.truncf %68 : vector<8x16xf32> to vector<8x16xbf16>
    %70 = vector.extract_strided_slice %38 {offsets = [0, 48], sizes = [8, 16], strides = [1, 1]} : vector<16x96xf32> to vector<8x16xf32>
    %71 = arith.truncf %70 : vector<8x16xf32> to vector<8x16xbf16>
    %72 = vector.extract_strided_slice %38 {offsets = [0, 80], sizes = [8, 16], strides = [1, 1]} : vector<16x96xf32> to vector<8x16xf32>
    %73 = arith.truncf %72 : vector<8x16xf32> to vector<8x16xbf16>
    %cst_30 = arith.constant dense<0.000000e+00> : vector<8x8xf32>
    %74 = tpu.matmul %69, %71, %cst_30 {dimension_numbers = #tpu.dot_dimension_numbers<[1], [1], [0], [0], [0, 0, 1, 0], [], []>} : vector<8x16xbf16>, vector<8x16xbf16>, vector<8x8xf32> -> vector<8x8xf32>
    %cst_31 = arith.constant 2.500000e-01 : f32
    %75 = vector.broadcast %cst_31 : f32 to vector<8x8xf32>
    %76 = arith.mulf %74, %75 : vector<8x8xf32>
    %77 = arith.addf %76, %6 : vector<8x8xf32>
    %cst_32 = arith.constant dense<0xFF800000> : vector<8xf32>
    %78 = vector.multi_reduction <maximumf>, %77, %cst_32 [1] : vector<8x8xf32> to vector<8xf32>
    %79 = vector.shape_cast %78 : vector<8xf32> to vector<8x1xf32>
    %80 = vector.broadcast %79 : vector<8x1xf32> to vector<8x8xf32>
    %81 = arith.subf %77, %80 : vector<8x8xf32>
    %82 = math.exp %81 : vector<8x8xf32>
    %cst_33 = arith.constant dense<0.000000e+00> : vector<8xf32>
    %83 = vector.multi_reduction <add>, %82, %cst_33 [1] : vector<8x8xf32> to vector<8xf32>
    %84 = vector.shape_cast %83 : vector<8xf32> to vector<8x1xf32>
    %85 = tpu.reciprocal %84 {approx = true} : vector<8x1xf32> -> vector<8x1xf32>
    %86 = vector.broadcast %85 : vector<8x1xf32> to vector<8x8xf32>
    %87 = arith.mulf %82, %86 : vector<8x8xf32>
    %88 = arith.truncf %87 : vector<8x8xf32> to vector<8x8xbf16>
    %cst_34 = arith.constant dense<0.000000e+00> : vector<8x16xf32>
    %89 = tpu.matmul %88, %73, %cst_34 {dimension_numbers = #tpu.dot_dimension_numbers<[1], [0], [0], [1], [0, 0, 1, 1], [], []>} : vector<8x8xbf16>, vector<8x16xbf16>, vector<8x16xf32> -> vector<8x16xf32>
    %90 = arith.truncf %89 : vector<8x16xf32> to vector<8x16xbf16>
    %91 = vector.extract_strided_slice %40 {offsets = [16, 0], sizes = [16, 32], strides = [1, 1]} : vector<32x32xbf16> to vector<16x32xbf16>
    %cst_35 = arith.constant dense<0.000000e+00> : vector<8x32xf32>
    %92 = tpu.matmul %90, %91, %cst_35 {dimension_numbers = #tpu.dot_dimension_numbers<[1], [0], [0], [1], [0, 0, 1, 1], [], []>} : vector<8x16xbf16>, vector<16x32xbf16>, vector<8x32xf32> -> vector<8x32xf32>
    %93 = arith.addf %67, %92 : vector<8x32xf32>
    %cst_36 = arith.constant 0.000000e+00 : f32
    %94 = vector.broadcast %cst_36 : f32 to vector<8x32xf32>
    %95 = vector.extract_strided_slice %38 {offsets = [8, 0], sizes = [8, 16], strides = [1, 1]} : vector<16x96xf32> to vector<8x16xf32>
    %96 = arith.truncf %95 : vector<8x16xf32> to vector<8x16xbf16>
    %97 = vector.extract_strided_slice %38 {offsets = [8, 32], sizes = [8, 16], strides = [1, 1]} : vector<16x96xf32> to vector<8x16xf32>
    %98 = arith.truncf %97 : vector<8x16xf32> to vector<8x16xbf16>
    %99 = vector.extract_strided_slice %38 {offsets = [8, 64], sizes = [8, 16], strides = [1, 1]} : vector<16x96xf32> to vector<8x16xf32>
    %100 = arith.truncf %99 : vector<8x16xf32> to vector<8x16xbf16>
    %cst_37 = arith.constant dense<0.000000e+00> : vector<8x8xf32>
    %101 = tpu.matmul %96, %98, %cst_37 {dimension_numbers = #tpu.dot_dimension_numbers<[1], [1], [0], [0], [0, 0, 1, 0], [], []>} : vector<8x16xbf16>, vector<8x16xbf16>, vector<8x8xf32> -> vector<8x8xf32>
    %cst_38 = arith.constant 2.500000e-01 : f32
    %102 = vector.broadcast %cst_38 : f32 to vector<8x8xf32>
    %103 = arith.mulf %101, %102 : vector<8x8xf32>
    %104 = arith.addf %103, %6 : vector<8x8xf32>
    %cst_39 = arith.constant dense<0xFF800000> : vector<8xf32>
    %105 = vector.multi_reduction <maximumf>, %104, %cst_39 [1] : vector<8x8xf32> to vector<8xf32>
    %106 = vector.shape_cast %105 : vector<8xf32> to vector<8x1xf32>
    %107 = vector.broadcast %106 : vector<8x1xf32> to vector<8x8xf32>
    %108 = arith.subf %104, %107 : vector<8x8xf32>
    %109 = math.exp %108 : vector<8x8xf32>
    %cst_40 = arith.constant dense<0.000000e+00> : vector<8xf32>
    %110 = vector.multi_reduction <add>, %109, %cst_40 [1] : vector<8x8xf32> to vector<8xf32>
    %111 = vector.shape_cast %110 : vector<8xf32> to vector<8x1xf32>
    %112 = tpu.reciprocal %111 {approx = true} : vector<8x1xf32> -> vector<8x1xf32>
    %113 = vector.broadcast %112 : vector<8x1xf32> to vector<8x8xf32>
    %114 = arith.mulf %109, %113 : vector<8x8xf32>
    %115 = arith.truncf %114 : vector<8x8xf32> to vector<8x8xbf16>
    %cst_41 = arith.constant dense<0.000000e+00> : vector<8x16xf32>
    %116 = tpu.matmul %115, %100, %cst_41 {dimension_numbers = #tpu.dot_dimension_numbers<[1], [0], [0], [1], [0, 0, 1, 1], [], []>} : vector<8x8xbf16>, vector<8x16xbf16>, vector<8x16xf32> -> vector<8x16xf32>
    %117 = arith.truncf %116 : vector<8x16xf32> to vector<8x16xbf16>
    %118 = vector.extract_strided_slice %40 {offsets = [0, 0], sizes = [16, 32], strides = [1, 1]} : vector<32x32xbf16> to vector<16x32xbf16>
    %cst_42 = arith.constant dense<0.000000e+00> : vector<8x32xf32>
    %119 = tpu.matmul %117, %118, %cst_42 {dimension_numbers = #tpu.dot_dimension_numbers<[1], [0], [0], [1], [0, 0, 1, 1], [], []>} : vector<8x16xbf16>, vector<16x32xbf16>, vector<8x32xf32> -> vector<8x32xf32>
    %120 = arith.addf %94, %119 : vector<8x32xf32>
    %121 = vector.extract_strided_slice %38 {offsets = [8, 16], sizes = [8, 16], strides = [1, 1]} : vector<16x96xf32> to vector<8x16xf32>
    %122 = arith.truncf %121 : vector<8x16xf32> to vector<8x16xbf16>
    %123 = vector.extract_strided_slice %38 {offsets = [8, 48], sizes = [8, 16], strides = [1, 1]} : vector<16x96xf32> to vector<8x16xf32>
    %124 = arith.truncf %123 : vector<8x16xf32> to vector<8x16xbf16>
    %125 = vector.extract_strided_slice %38 {offsets = [8, 80], sizes = [8, 16], strides = [1, 1]} : vector<16x96xf32> to vector<8x16xf32>
    %126 = arith.truncf %125 : vector<8x16xf32> to vector<8x16xbf16>
    %cst_43 = arith.constant dense<0.000000e+00> : vector<8x8xf32>
    %127 = tpu.matmul %122, %124, %cst_43 {dimension_numbers = #tpu.dot_dimension_numbers<[1], [1], [0], [0], [0, 0, 1, 0], [], []>} : vector<8x16xbf16>, vector<8x16xbf16>, vector<8x8xf32> -> vector<8x8xf32>
    %cst_44 = arith.constant 2.500000e-01 : f32
    %128 = vector.broadcast %cst_44 : f32 to vector<8x8xf32>
    %129 = arith.mulf %127, %128 : vector<8x8xf32>
    %130 = arith.addf %129, %6 : vector<8x8xf32>
    %cst_45 = arith.constant dense<0xFF800000> : vector<8xf32>
    %131 = vector.multi_reduction <maximumf>, %130, %cst_45 [1] : vector<8x8xf32> to vector<8xf32>
    %132 = vector.shape_cast %131 : vector<8xf32> to vector<8x1xf32>
    %133 = vector.broadcast %132 : vector<8x1xf32> to vector<8x8xf32>
    %134 = arith.subf %130, %133 : vector<8x8xf32>
    %135 = math.exp %134 : vector<8x8xf32>
    %cst_46 = arith.constant dense<0.000000e+00> : vector<8xf32>
    %136 = vector.multi_reduction <add>, %135, %cst_46 [1] : vector<8x8xf32> to vector<8xf32>
    %137 = vector.shape_cast %136 : vector<8xf32> to vector<8x1xf32>
    %138 = tpu.reciprocal %137 {approx = true} : vector<8x1xf32> -> vector<8x1xf32>
    %139 = vector.broadcast %138 : vector<8x1xf32> to vector<8x8xf32>
    %140 = arith.mulf %135, %139 : vector<8x8xf32>
    %141 = arith.truncf %140 : vector<8x8xf32> to vector<8x8xbf16>
    %cst_47 = arith.constant dense<0.000000e+00> : vector<8x16xf32>
    %142 = tpu.matmul %141, %126, %cst_47 {dimension_numbers = #tpu.dot_dimension_numbers<[1], [0], [0], [1], [0, 0, 1, 1], [], []>} : vector<8x8xbf16>, vector<8x16xbf16>, vector<8x16xf32> -> vector<8x16xf32>
    %143 = arith.truncf %142 : vector<8x16xf32> to vector<8x16xbf16>
    %144 = vector.extract_strided_slice %40 {offsets = [16, 0], sizes = [16, 32], strides = [1, 1]} : vector<32x32xbf16> to vector<16x32xbf16>
    %cst_48 = arith.constant dense<0.000000e+00> : vector<8x32xf32>
    %145 = tpu.matmul %143, %144, %cst_48 {dimension_numbers = #tpu.dot_dimension_numbers<[1], [0], [0], [1], [0, 0, 1, 1], [], []>} : vector<8x16xbf16>, vector<16x32xbf16>, vector<8x32xf32> -> vector<8x32xf32>
    %146 = arith.addf %120, %145 : vector<8x32xf32>
    %147 = tpu.concatenate %93, %146 in 0 : vector<8x32xf32>, vector<8x32xf32> -> vector<16x32xf32>
    %c0_49 = arith.constant 0 : index
    %c0_50 = arith.constant 0 : index
    %c0_51 = arith.constant 0 : index
    %148 = vector.load %arg6[%c0_49, %c0_50, %c0_51] : memref<2x1x32xf32, #tpu.memory_space<vmem>>, vector<1x1x32xf32>
    %149 = vector.shape_cast %148 : vector<1x1x32xf32> to vector<1x32xf32>
    %150 = vector.broadcast %149 : vector<1x32xf32> to vector<16x32xf32>
    %151 = arith.addf %147, %150 : vector<16x32xf32>
    %152 = arith.addf %0, %151 : vector<16x32xf32>
    %c0_52 = arith.constant 0 : index
    %c0_53 = arith.constant 0 : index
    %c0_54 = arith.constant 0 : index
    %153 = vector.load %arg7[%c0_52, %c0_53, %c0_54] : memref<2x1x32xf32, #tpu.memory_space<vmem>>, vector<1x1x32xf32>
    %154 = vector.shape_cast %153 : vector<1x1x32xf32> to vector<1x32xf32>
    %c0_55 = arith.constant 0 : index
    %c0_56 = arith.constant 0 : index
    %c0_57 = arith.constant 0 : index
    %155 = vector.load %arg8[%c0_55, %c0_56, %c0_57] : memref<2x1x32xf32, #tpu.memory_space<vmem>>, vector<1x1x32xf32>
    %156 = vector.shape_cast %155 : vector<1x1x32xf32> to vector<1x32xf32>
    %cst_58 = arith.constant dense<0.000000e+00> : vector<16xf32>
    %157 = vector.multi_reduction <add>, %152, %cst_58 [1] : vector<16x32xf32> to vector<16xf32>
    %158 = vector.shape_cast %157 : vector<16xf32> to vector<16x1xf32>
    %cst_59 = arith.constant 3.200000e+01 : f32
    %159 = vector.broadcast %cst_59 : f32 to vector<16x1xf32>
    %160 = arith.divf %158, %159 : vector<16x1xf32>
    %161 = vector.broadcast %160 : vector<16x1xf32> to vector<16x32xf32>
    %162 = arith.subf %152, %161 : vector<16x32xf32>
    %163 = arith.mulf %162, %162 : vector<16x32xf32>
    %cst_60 = arith.constant dense<0.000000e+00> : vector<16xf32>
    %164 = vector.multi_reduction <add>, %163, %cst_60 [1] : vector<16x32xf32> to vector<16xf32>
    %165 = vector.shape_cast %164 : vector<16xf32> to vector<16x1xf32>
    %cst_61 = arith.constant 3.200000e+01 : f32
    %166 = vector.broadcast %cst_61 : f32 to vector<16x1xf32>
    %167 = arith.divf %165, %166 : vector<16x1xf32>
    %cst_62 = arith.constant 9.99999974E-6 : f32
    %168 = vector.broadcast %cst_62 : f32 to vector<16x1xf32>
    %169 = arith.addf %167, %168 : vector<16x1xf32>
    %170 = math.rsqrt %169 : vector<16x1xf32>
    %171 = vector.broadcast %170 : vector<16x1xf32> to vector<16x32xf32>
    %172 = arith.mulf %162, %171 : vector<16x32xf32>
    %173 = vector.broadcast %154 : vector<1x32xf32> to vector<16x32xf32>
    %174 = arith.mulf %172, %173 : vector<16x32xf32>
    %175 = vector.broadcast %156 : vector<1x32xf32> to vector<16x32xf32>
    %176 = arith.addf %174, %175 : vector<16x32xf32>
    %177 = arith.truncf %176 : vector<16x32xf32> to vector<16x32xbf16>
    %c0_63 = arith.constant 0 : index
    %c0_64 = arith.constant 0 : index
    %c0_65 = arith.constant 0 : index
    %178 = vector.load %arg9[%c0_63, %c0_64, %c0_65] : memref<2x32x128xbf16, #tpu.memory_space<vmem>>, vector<1x32x128xbf16>
    %179 = vector.shape_cast %178 : vector<1x32x128xbf16> to vector<32x128xbf16>
    %cst_66 = arith.constant dense<0.000000e+00> : vector<16x128xf32>
    %180 = tpu.matmul %177, %179, %cst_66 {dimension_numbers = #tpu.dot_dimension_numbers<[1], [0], [0], [1], [0, 0, 1, 1], [], []>} : vector<16x32xbf16>, vector<32x128xbf16>, vector<16x128xf32> -> vector<16x128xf32>
    %c0_67 = arith.constant 0 : index
    %c0_68 = arith.constant 0 : index
    %c0_69 = arith.constant 0 : index
    %181 = vector.load %arg10[%c0_67, %c0_68, %c0_69] : memref<2x1x128xf32, #tpu.memory_space<vmem>>, vector<1x1x128xf32>
    %182 = vector.shape_cast %181 : vector<1x1x128xf32> to vector<1x128xf32>
    %183 = vector.broadcast %182 : vector<1x128xf32> to vector<16x128xf32>
    %184 = arith.addf %180, %183 : vector<16x128xf32>
    %cst_70 = arith.constant 5.000000e-01 : f32
    %185 = vector.broadcast %cst_70 : f32 to vector<16x128xf32>
    %186 = arith.mulf %185, %184 : vector<16x128xf32>
    %cst_71 = arith.constant 4.471500e-02 : f32
    %187 = vector.broadcast %cst_71 : f32 to vector<16x128xf32>
    %188 = arith.mulf %187, %184 : vector<16x128xf32>
    %189 = arith.mulf %188, %184 : vector<16x128xf32>
    %190 = arith.mulf %189, %184 : vector<16x128xf32>
    %191 = arith.addf %184, %190 : vector<16x128xf32>
    %cst_72 = arith.constant 0.797884583 : f32
    %192 = vector.broadcast %cst_72 : f32 to vector<16x128xf32>
    %193 = arith.mulf %192, %191 : vector<16x128xf32>
    %194 = math.tanh %193 : vector<16x128xf32>
    %cst_73 = arith.constant 1.000000e+00 : f32
    %195 = vector.broadcast %cst_73 : f32 to vector<16x128xf32>
    %196 = arith.addf %195, %194 : vector<16x128xf32>
    %197 = arith.mulf %186, %196 : vector<16x128xf32>
    %198 = arith.truncf %197 : vector<16x128xf32> to vector<16x128xbf16>
    %c0_74 = arith.constant 0 : index
    %c0_75 = arith.constant 0 : index
    %c0_76 = arith.constant 0 : index
    %199 = vector.load %arg11[%c0_74, %c0_75, %c0_76] : memref<2x128x32xbf16, #tpu.memory_space<vmem>>, vector<1x128x32xbf16>
    %200 = vector.shape_cast %199 : vector<1x128x32xbf16> to vector<128x32xbf16>
    %cst_77 = arith.constant dense<0.000000e+00> : vector<16x32xf32>
    %201 = tpu.matmul %198, %200, %cst_77 {dimension_numbers = #tpu.dot_dimension_numbers<[1], [0], [0], [1], [0, 0, 1, 1], [], []>} : vector<16x128xbf16>, vector<128x32xbf16>, vector<16x32xf32> -> vector<16x32xf32>
    %202 = arith.addf %152, %201 : vector<16x32xf32>
    %c0_78 = arith.constant 0 : index
    %c0_79 = arith.constant 0 : index
    %c0_80 = arith.constant 0 : index
    %203 = vector.load %arg12[%c0_78, %c0_79, %c0_80] : memref<2x1x32xf32, #tpu.memory_space<vmem>>, vector<1x1x32xf32>
    %204 = vector.shape_cast %203 : vector<1x1x32xf32> to vector<1x32xf32>
    %205 = vector.broadcast %204 : vector<1x32xf32> to vector<16x32xf32>
    %206 = arith.addf %202, %205 : vector<16x32xf32>
    %c1 = arith.constant 1 : index
    %c0_81 = arith.constant 0 : index
    %c0_82 = arith.constant 0 : index
    %207 = vector.load %arg1[%c1, %c0_81, %c0_82] : memref<2x1x32xf32, #tpu.memory_space<vmem>>, vector<1x1x32xf32>
    %208 = vector.shape_cast %207 : vector<1x1x32xf32> to vector<1x32xf32>
    %c1_83 = arith.constant 1 : index
    %c0_84 = arith.constant 0 : index
    %c0_85 = arith.constant 0 : index
    %209 = vector.load %arg2[%c1_83, %c0_84, %c0_85] : memref<2x1x32xf32, #tpu.memory_space<vmem>>, vector<1x1x32xf32>
    %210 = vector.shape_cast %209 : vector<1x1x32xf32> to vector<1x32xf32>
    %cst_86 = arith.constant dense<0.000000e+00> : vector<16xf32>
    %211 = vector.multi_reduction <add>, %206, %cst_86 [1] : vector<16x32xf32> to vector<16xf32>
    %212 = vector.shape_cast %211 : vector<16xf32> to vector<16x1xf32>
    %cst_87 = arith.constant 3.200000e+01 : f32
    %213 = vector.broadcast %cst_87 : f32 to vector<16x1xf32>
    %214 = arith.divf %212, %213 : vector<16x1xf32>
    %215 = vector.broadcast %214 : vector<16x1xf32> to vector<16x32xf32>
    %216 = arith.subf %206, %215 : vector<16x32xf32>
    %217 = arith.mulf %216, %216 : vector<16x32xf32>
    %cst_88 = arith.constant dense<0.000000e+00> : vector<16xf32>
    %218 = vector.multi_reduction <add>, %217, %cst_88 [1] : vector<16x32xf32> to vector<16xf32>
    %219 = vector.shape_cast %218 : vector<16xf32> to vector<16x1xf32>
    %cst_89 = arith.constant 3.200000e+01 : f32
    %220 = vector.broadcast %cst_89 : f32 to vector<16x1xf32>
    %221 = arith.divf %219, %220 : vector<16x1xf32>
    %cst_90 = arith.constant 9.99999974E-6 : f32
    %222 = vector.broadcast %cst_90 : f32 to vector<16x1xf32>
    %223 = arith.addf %221, %222 : vector<16x1xf32>
    %224 = math.rsqrt %223 : vector<16x1xf32>
    %225 = vector.broadcast %224 : vector<16x1xf32> to vector<16x32xf32>
    %226 = arith.mulf %216, %225 : vector<16x32xf32>
    %227 = vector.broadcast %208 : vector<1x32xf32> to vector<16x32xf32>
    %228 = arith.mulf %226, %227 : vector<16x32xf32>
    %229 = vector.broadcast %210 : vector<1x32xf32> to vector<16x32xf32>
    %230 = arith.addf %228, %229 : vector<16x32xf32>
    %231 = arith.truncf %230 : vector<16x32xf32> to vector<16x32xbf16>
    %c1_91 = arith.constant 1 : index
    %c0_92 = arith.constant 0 : index
    %c0_93 = arith.constant 0 : index
    %232 = vector.load %arg3[%c1_91, %c0_92, %c0_93] : memref<2x32x96xbf16, #tpu.memory_space<vmem>>, vector<1x32x96xbf16>
    %233 = vector.shape_cast %232 : vector<1x32x96xbf16> to vector<32x96xbf16>
    %cst_94 = arith.constant dense<0.000000e+00> : vector<16x96xf32>
    %234 = tpu.matmul %231, %233, %cst_94 {dimension_numbers = #tpu.dot_dimension_numbers<[1], [0], [0], [1], [0, 0, 1, 1], [], []>} : vector<16x32xbf16>, vector<32x96xbf16>, vector<16x96xf32> -> vector<16x96xf32>
    %c1_95 = arith.constant 1 : index
    %c0_96 = arith.constant 0 : index
    %c0_97 = arith.constant 0 : index
    %235 = vector.load %arg4[%c1_95, %c0_96, %c0_97] : memref<2x1x96xf32, #tpu.memory_space<vmem>>, vector<1x1x96xf32>
    %236 = vector.shape_cast %235 : vector<1x1x96xf32> to vector<1x96xf32>
    %237 = vector.broadcast %236 : vector<1x96xf32> to vector<16x96xf32>
    %238 = arith.addf %234, %237 : vector<16x96xf32>
    %c1_98 = arith.constant 1 : index
    %c0_99 = arith.constant 0 : index
    %c0_100 = arith.constant 0 : index
    %239 = vector.load %arg5[%c1_98, %c0_99, %c0_100] : memref<2x32x32xbf16, #tpu.memory_space<vmem>>, vector<1x32x32xbf16>
    %240 = vector.shape_cast %239 : vector<1x32x32xbf16> to vector<32x32xbf16>
    %cst_101 = arith.constant 0.000000e+00 : f32
    %241 = vector.broadcast %cst_101 : f32 to vector<8x32xf32>
    %242 = vector.extract_strided_slice %238 {offsets = [0, 0], sizes = [8, 16], strides = [1, 1]} : vector<16x96xf32> to vector<8x16xf32>
    %243 = arith.truncf %242 : vector<8x16xf32> to vector<8x16xbf16>
    %244 = vector.extract_strided_slice %238 {offsets = [0, 32], sizes = [8, 16], strides = [1, 1]} : vector<16x96xf32> to vector<8x16xf32>
    %245 = arith.truncf %244 : vector<8x16xf32> to vector<8x16xbf16>
    %246 = vector.extract_strided_slice %238 {offsets = [0, 64], sizes = [8, 16], strides = [1, 1]} : vector<16x96xf32> to vector<8x16xf32>
    %247 = arith.truncf %246 : vector<8x16xf32> to vector<8x16xbf16>
    %cst_102 = arith.constant dense<0.000000e+00> : vector<8x8xf32>
    %248 = tpu.matmul %243, %245, %cst_102 {dimension_numbers = #tpu.dot_dimension_numbers<[1], [1], [0], [0], [0, 0, 1, 0], [], []>} : vector<8x16xbf16>, vector<8x16xbf16>, vector<8x8xf32> -> vector<8x8xf32>
    %cst_103 = arith.constant 2.500000e-01 : f32
    %249 = vector.broadcast %cst_103 : f32 to vector<8x8xf32>
    %250 = arith.mulf %248, %249 : vector<8x8xf32>
    %251 = arith.addf %250, %6 : vector<8x8xf32>
    %cst_104 = arith.constant dense<0xFF800000> : vector<8xf32>
    %252 = vector.multi_reduction <maximumf>, %251, %cst_104 [1] : vector<8x8xf32> to vector<8xf32>
    %253 = vector.shape_cast %252 : vector<8xf32> to vector<8x1xf32>
    %254 = vector.broadcast %253 : vector<8x1xf32> to vector<8x8xf32>
    %255 = arith.subf %251, %254 : vector<8x8xf32>
    %256 = math.exp %255 : vector<8x8xf32>
    %cst_105 = arith.constant dense<0.000000e+00> : vector<8xf32>
    %257 = vector.multi_reduction <add>, %256, %cst_105 [1] : vector<8x8xf32> to vector<8xf32>
    %258 = vector.shape_cast %257 : vector<8xf32> to vector<8x1xf32>
    %259 = tpu.reciprocal %258 {approx = true} : vector<8x1xf32> -> vector<8x1xf32>
    %260 = vector.broadcast %259 : vector<8x1xf32> to vector<8x8xf32>
    %261 = arith.mulf %256, %260 : vector<8x8xf32>
    %262 = arith.truncf %261 : vector<8x8xf32> to vector<8x8xbf16>
    %cst_106 = arith.constant dense<0.000000e+00> : vector<8x16xf32>
    %263 = tpu.matmul %262, %247, %cst_106 {dimension_numbers = #tpu.dot_dimension_numbers<[1], [0], [0], [1], [0, 0, 1, 1], [], []>} : vector<8x8xbf16>, vector<8x16xbf16>, vector<8x16xf32> -> vector<8x16xf32>
    %264 = arith.truncf %263 : vector<8x16xf32> to vector<8x16xbf16>
    %265 = vector.extract_strided_slice %240 {offsets = [0, 0], sizes = [16, 32], strides = [1, 1]} : vector<32x32xbf16> to vector<16x32xbf16>
    %cst_107 = arith.constant dense<0.000000e+00> : vector<8x32xf32>
    %266 = tpu.matmul %264, %265, %cst_107 {dimension_numbers = #tpu.dot_dimension_numbers<[1], [0], [0], [1], [0, 0, 1, 1], [], []>} : vector<8x16xbf16>, vector<16x32xbf16>, vector<8x32xf32> -> vector<8x32xf32>
    %267 = arith.addf %241, %266 : vector<8x32xf32>
    %268 = vector.extract_strided_slice %238 {offsets = [0, 16], sizes = [8, 16], strides = [1, 1]} : vector<16x96xf32> to vector<8x16xf32>
    %269 = arith.truncf %268 : vector<8x16xf32> to vector<8x16xbf16>
    %270 = vector.extract_strided_slice %238 {offsets = [0, 48], sizes = [8, 16], strides = [1, 1]} : vector<16x96xf32> to vector<8x16xf32>
    %271 = arith.truncf %270 : vector<8x16xf32> to vector<8x16xbf16>
    %272 = vector.extract_strided_slice %238 {offsets = [0, 80], sizes = [8, 16], strides = [1, 1]} : vector<16x96xf32> to vector<8x16xf32>
    %273 = arith.truncf %272 : vector<8x16xf32> to vector<8x16xbf16>
    %cst_108 = arith.constant dense<0.000000e+00> : vector<8x8xf32>
    %274 = tpu.matmul %269, %271, %cst_108 {dimension_numbers = #tpu.dot_dimension_numbers<[1], [1], [0], [0], [0, 0, 1, 0], [], []>} : vector<8x16xbf16>, vector<8x16xbf16>, vector<8x8xf32> -> vector<8x8xf32>
    %cst_109 = arith.constant 2.500000e-01 : f32
    %275 = vector.broadcast %cst_109 : f32 to vector<8x8xf32>
    %276 = arith.mulf %274, %275 : vector<8x8xf32>
    %277 = arith.addf %276, %6 : vector<8x8xf32>
    %cst_110 = arith.constant dense<0xFF800000> : vector<8xf32>
    %278 = vector.multi_reduction <maximumf>, %277, %cst_110 [1] : vector<8x8xf32> to vector<8xf32>
    %279 = vector.shape_cast %278 : vector<8xf32> to vector<8x1xf32>
    %280 = vector.broadcast %279 : vector<8x1xf32> to vector<8x8xf32>
    %281 = arith.subf %277, %280 : vector<8x8xf32>
    %282 = math.exp %281 : vector<8x8xf32>
    %cst_111 = arith.constant dense<0.000000e+00> : vector<8xf32>
    %283 = vector.multi_reduction <add>, %282, %cst_111 [1] : vector<8x8xf32> to vector<8xf32>
    %284 = vector.shape_cast %283 : vector<8xf32> to vector<8x1xf32>
    %285 = tpu.reciprocal %284 {approx = true} : vector<8x1xf32> -> vector<8x1xf32>
    %286 = vector.broadcast %285 : vector<8x1xf32> to vector<8x8xf32>
    %287 = arith.mulf %282, %286 : vector<8x8xf32>
    %288 = arith.truncf %287 : vector<8x8xf32> to vector<8x8xbf16>
    %cst_112 = arith.constant dense<0.000000e+00> : vector<8x16xf32>
    %289 = tpu.matmul %288, %273, %cst_112 {dimension_numbers = #tpu.dot_dimension_numbers<[1], [0], [0], [1], [0, 0, 1, 1], [], []>} : vector<8x8xbf16>, vector<8x16xbf16>, vector<8x16xf32> -> vector<8x16xf32>
    %290 = arith.truncf %289 : vector<8x16xf32> to vector<8x16xbf16>
    %291 = vector.extract_strided_slice %240 {offsets = [16, 0], sizes = [16, 32], strides = [1, 1]} : vector<32x32xbf16> to vector<16x32xbf16>
    %cst_113 = arith.constant dense<0.000000e+00> : vector<8x32xf32>
    %292 = tpu.matmul %290, %291, %cst_113 {dimension_numbers = #tpu.dot_dimension_numbers<[1], [0], [0], [1], [0, 0, 1, 1], [], []>} : vector<8x16xbf16>, vector<16x32xbf16>, vector<8x32xf32> -> vector<8x32xf32>
    %293 = arith.addf %267, %292 : vector<8x32xf32>
    %cst_114 = arith.constant 0.000000e+00 : f32
    %294 = vector.broadcast %cst_114 : f32 to vector<8x32xf32>
    %295 = vector.extract_strided_slice %238 {offsets = [8, 0], sizes = [8, 16], strides = [1, 1]} : vector<16x96xf32> to vector<8x16xf32>
    %296 = arith.truncf %295 : vector<8x16xf32> to vector<8x16xbf16>
    %297 = vector.extract_strided_slice %238 {offsets = [8, 32], sizes = [8, 16], strides = [1, 1]} : vector<16x96xf32> to vector<8x16xf32>
    %298 = arith.truncf %297 : vector<8x16xf32> to vector<8x16xbf16>
    %299 = vector.extract_strided_slice %238 {offsets = [8, 64], sizes = [8, 16], strides = [1, 1]} : vector<16x96xf32> to vector<8x16xf32>
    %300 = arith.truncf %299 : vector<8x16xf32> to vector<8x16xbf16>
    %cst_115 = arith.constant dense<0.000000e+00> : vector<8x8xf32>
    %301 = tpu.matmul %296, %298, %cst_115 {dimension_numbers = #tpu.dot_dimension_numbers<[1], [1], [0], [0], [0, 0, 1, 0], [], []>} : vector<8x16xbf16>, vector<8x16xbf16>, vector<8x8xf32> -> vector<8x8xf32>
    %cst_116 = arith.constant 2.500000e-01 : f32
    %302 = vector.broadcast %cst_116 : f32 to vector<8x8xf32>
    %303 = arith.mulf %301, %302 : vector<8x8xf32>
    %304 = arith.addf %303, %6 : vector<8x8xf32>
    %cst_117 = arith.constant dense<0xFF800000> : vector<8xf32>
    %305 = vector.multi_reduction <maximumf>, %304, %cst_117 [1] : vector<8x8xf32> to vector<8xf32>
    %306 = vector.shape_cast %305 : vector<8xf32> to vector<8x1xf32>
    %307 = vector.broadcast %306 : vector<8x1xf32> to vector<8x8xf32>
    %308 = arith.subf %304, %307 : vector<8x8xf32>
    %309 = math.exp %308 : vector<8x8xf32>
    %cst_118 = arith.constant dense<0.000000e+00> : vector<8xf32>
    %310 = vector.multi_reduction <add>, %309, %cst_118 [1] : vector<8x8xf32> to vector<8xf32>
    %311 = vector.shape_cast %310 : vector<8xf32> to vector<8x1xf32>
    %312 = tpu.reciprocal %311 {approx = true} : vector<8x1xf32> -> vector<8x1xf32>
    %313 = vector.broadcast %312 : vector<8x1xf32> to vector<8x8xf32>
    %314 = arith.mulf %309, %313 : vector<8x8xf32>
    %315 = arith.truncf %314 : vector<8x8xf32> to vector<8x8xbf16>
    %cst_119 = arith.constant dense<0.000000e+00> : vector<8x16xf32>
    %316 = tpu.matmul %315, %300, %cst_119 {dimension_numbers = #tpu.dot_dimension_numbers<[1], [0], [0], [1], [0, 0, 1, 1], [], []>} : vector<8x8xbf16>, vector<8x16xbf16>, vector<8x16xf32> -> vector<8x16xf32>
    %317 = arith.truncf %316 : vector<8x16xf32> to vector<8x16xbf16>
    %318 = vector.extract_strided_slice %240 {offsets = [0, 0], sizes = [16, 32], strides = [1, 1]} : vector<32x32xbf16> to vector<16x32xbf16>
    %cst_120 = arith.constant dense<0.000000e+00> : vector<8x32xf32>
    %319 = tpu.matmul %317, %318, %cst_120 {dimension_numbers = #tpu.dot_dimension_numbers<[1], [0], [0], [1], [0, 0, 1, 1], [], []>} : vector<8x16xbf16>, vector<16x32xbf16>, vector<8x32xf32> -> vector<8x32xf32>
    %320 = arith.addf %294, %319 : vector<8x32xf32>
    %321 = vector.extract_strided_slice %238 {offsets = [8, 16], sizes = [8, 16], strides = [1, 1]} : vector<16x96xf32> to vector<8x16xf32>
    %322 = arith.truncf %321 : vector<8x16xf32> to vector<8x16xbf16>
    %323 = vector.extract_strided_slice %238 {offsets = [8, 48], sizes = [8, 16], strides = [1, 1]} : vector<16x96xf32> to vector<8x16xf32>
    %324 = arith.truncf %323 : vector<8x16xf32> to vector<8x16xbf16>
    %325 = vector.extract_strided_slice %238 {offsets = [8, 80], sizes = [8, 16], strides = [1, 1]} : vector<16x96xf32> to vector<8x16xf32>
    %326 = arith.truncf %325 : vector<8x16xf32> to vector<8x16xbf16>
    %cst_121 = arith.constant dense<0.000000e+00> : vector<8x8xf32>
    %327 = tpu.matmul %322, %324, %cst_121 {dimension_numbers = #tpu.dot_dimension_numbers<[1], [1], [0], [0], [0, 0, 1, 0], [], []>} : vector<8x16xbf16>, vector<8x16xbf16>, vector<8x8xf32> -> vector<8x8xf32>
    %cst_122 = arith.constant 2.500000e-01 : f32
    %328 = vector.broadcast %cst_122 : f32 to vector<8x8xf32>
    %329 = arith.mulf %327, %328 : vector<8x8xf32>
    %330 = arith.addf %329, %6 : vector<8x8xf32>
    %cst_123 = arith.constant dense<0xFF800000> : vector<8xf32>
    %331 = vector.multi_reduction <maximumf>, %330, %cst_123 [1] : vector<8x8xf32> to vector<8xf32>
    %332 = vector.shape_cast %331 : vector<8xf32> to vector<8x1xf32>
    %333 = vector.broadcast %332 : vector<8x1xf32> to vector<8x8xf32>
    %334 = arith.subf %330, %333 : vector<8x8xf32>
    %335 = math.exp %334 : vector<8x8xf32>
    %cst_124 = arith.constant dense<0.000000e+00> : vector<8xf32>
    %336 = vector.multi_reduction <add>, %335, %cst_124 [1] : vector<8x8xf32> to vector<8xf32>
    %337 = vector.shape_cast %336 : vector<8xf32> to vector<8x1xf32>
    %338 = tpu.reciprocal %337 {approx = true} : vector<8x1xf32> -> vector<8x1xf32>
    %339 = vector.broadcast %338 : vector<8x1xf32> to vector<8x8xf32>
    %340 = arith.mulf %335, %339 : vector<8x8xf32>
    %341 = arith.truncf %340 : vector<8x8xf32> to vector<8x8xbf16>
    %cst_125 = arith.constant dense<0.000000e+00> : vector<8x16xf32>
    %342 = tpu.matmul %341, %326, %cst_125 {dimension_numbers = #tpu.dot_dimension_numbers<[1], [0], [0], [1], [0, 0, 1, 1], [], []>} : vector<8x8xbf16>, vector<8x16xbf16>, vector<8x16xf32> -> vector<8x16xf32>
    %343 = arith.truncf %342 : vector<8x16xf32> to vector<8x16xbf16>
    %344 = vector.extract_strided_slice %240 {offsets = [16, 0], sizes = [16, 32], strides = [1, 1]} : vector<32x32xbf16> to vector<16x32xbf16>
    %cst_126 = arith.constant dense<0.000000e+00> : vector<8x32xf32>
    %345 = tpu.matmul %343, %344, %cst_126 {dimension_numbers = #tpu.dot_dimension_numbers<[1], [0], [0], [1], [0, 0, 1, 1], [], []>} : vector<8x16xbf16>, vector<16x32xbf16>, vector<8x32xf32> -> vector<8x32xf32>
    %346 = arith.addf %320, %345 : vector<8x32xf32>
    %347 = tpu.concatenate %293, %346 in 0 : vector<8x32xf32>, vector<8x32xf32> -> vector<16x32xf32>
    %c1_127 = arith.constant 1 : index
    %c0_128 = arith.constant 0 : index
    %c0_129 = arith.constant 0 : index
    %348 = vector.load %arg6[%c1_127, %c0_128, %c0_129] : memref<2x1x32xf32, #tpu.memory_space<vmem>>, vector<1x1x32xf32>
    %349 = vector.shape_cast %348 : vector<1x1x32xf32> to vector<1x32xf32>
    %350 = vector.broadcast %349 : vector<1x32xf32> to vector<16x32xf32>
    %351 = arith.addf %347, %350 : vector<16x32xf32>
    %352 = arith.addf %206, %351 : vector<16x32xf32>
    %c1_130 = arith.constant 1 : index
    %c0_131 = arith.constant 0 : index
    %c0_132 = arith.constant 0 : index
    %353 = vector.load %arg7[%c1_130, %c0_131, %c0_132] : memref<2x1x32xf32, #tpu.memory_space<vmem>>, vector<1x1x32xf32>
    %354 = vector.shape_cast %353 : vector<1x1x32xf32> to vector<1x32xf32>
    %c1_133 = arith.constant 1 : index
    %c0_134 = arith.constant 0 : index
    %c0_135 = arith.constant 0 : index
    %355 = vector.load %arg8[%c1_133, %c0_134, %c0_135] : memref<2x1x32xf32, #tpu.memory_space<vmem>>, vector<1x1x32xf32>
    %356 = vector.shape_cast %355 : vector<1x1x32xf32> to vector<1x32xf32>
    %cst_136 = arith.constant dense<0.000000e+00> : vector<16xf32>
    %357 = vector.multi_reduction <add>, %352, %cst_136 [1] : vector<16x32xf32> to vector<16xf32>
    %358 = vector.shape_cast %357 : vector<16xf32> to vector<16x1xf32>
    %cst_137 = arith.constant 3.200000e+01 : f32
    %359 = vector.broadcast %cst_137 : f32 to vector<16x1xf32>
    %360 = arith.divf %358, %359 : vector<16x1xf32>
    %361 = vector.broadcast %360 : vector<16x1xf32> to vector<16x32xf32>
    %362 = arith.subf %352, %361 : vector<16x32xf32>
    %363 = arith.mulf %362, %362 : vector<16x32xf32>
    %cst_138 = arith.constant dense<0.000000e+00> : vector<16xf32>
    %364 = vector.multi_reduction <add>, %363, %cst_138 [1] : vector<16x32xf32> to vector<16xf32>
    %365 = vector.shape_cast %364 : vector<16xf32> to vector<16x1xf32>
    %cst_139 = arith.constant 3.200000e+01 : f32
    %366 = vector.broadcast %cst_139 : f32 to vector<16x1xf32>
    %367 = arith.divf %365, %366 : vector<16x1xf32>
    %cst_140 = arith.constant 9.99999974E-6 : f32
    %368 = vector.broadcast %cst_140 : f32 to vector<16x1xf32>
    %369 = arith.addf %367, %368 : vector<16x1xf32>
    %370 = math.rsqrt %369 : vector<16x1xf32>
    %371 = vector.broadcast %370 : vector<16x1xf32> to vector<16x32xf32>
    %372 = arith.mulf %362, %371 : vector<16x32xf32>
    %373 = vector.broadcast %354 : vector<1x32xf32> to vector<16x32xf32>
    %374 = arith.mulf %372, %373 : vector<16x32xf32>
    %375 = vector.broadcast %356 : vector<1x32xf32> to vector<16x32xf32>
    %376 = arith.addf %374, %375 : vector<16x32xf32>
    %377 = arith.truncf %376 : vector<16x32xf32> to vector<16x32xbf16>
    %c1_141 = arith.constant 1 : index
    %c0_142 = arith.constant 0 : index
    %c0_143 = arith.constant 0 : index
    %378 = vector.load %arg9[%c1_141, %c0_142, %c0_143] : memref<2x32x128xbf16, #tpu.memory_space<vmem>>, vector<1x32x128xbf16>
    %379 = vector.shape_cast %378 : vector<1x32x128xbf16> to vector<32x128xbf16>
    %cst_144 = arith.constant dense<0.000000e+00> : vector<16x128xf32>
    %380 = tpu.matmul %377, %379, %cst_144 {dimension_numbers = #tpu.dot_dimension_numbers<[1], [0], [0], [1], [0, 0, 1, 1], [], []>} : vector<16x32xbf16>, vector<32x128xbf16>, vector<16x128xf32> -> vector<16x128xf32>
    %c1_145 = arith.constant 1 : index
    %c0_146 = arith.constant 0 : index
    %c0_147 = arith.constant 0 : index
    %381 = vector.load %arg10[%c1_145, %c0_146, %c0_147] : memref<2x1x128xf32, #tpu.memory_space<vmem>>, vector<1x1x128xf32>
    %382 = vector.shape_cast %381 : vector<1x1x128xf32> to vector<1x128xf32>
    %383 = vector.broadcast %382 : vector<1x128xf32> to vector<16x128xf32>
    %384 = arith.addf %380, %383 : vector<16x128xf32>
    %cst_148 = arith.constant 5.000000e-01 : f32
    %385 = vector.broadcast %cst_148 : f32 to vector<16x128xf32>
    %386 = arith.mulf %385, %384 : vector<16x128xf32>
    %cst_149 = arith.constant 4.471500e-02 : f32
    %387 = vector.broadcast %cst_149 : f32 to vector<16x128xf32>
    %388 = arith.mulf %387, %384 : vector<16x128xf32>
    %389 = arith.mulf %388, %384 : vector<16x128xf32>
    %390 = arith.mulf %389, %384 : vector<16x128xf32>
    %391 = arith.addf %384, %390 : vector<16x128xf32>
    %cst_150 = arith.constant 0.797884583 : f32
    %392 = vector.broadcast %cst_150 : f32 to vector<16x128xf32>
    %393 = arith.mulf %392, %391 : vector<16x128xf32>
    %394 = math.tanh %393 : vector<16x128xf32>
    %cst_151 = arith.constant 1.000000e+00 : f32
    %395 = vector.broadcast %cst_151 : f32 to vector<16x128xf32>
    %396 = arith.addf %395, %394 : vector<16x128xf32>
    %397 = arith.mulf %386, %396 : vector<16x128xf32>
    %398 = arith.truncf %397 : vector<16x128xf32> to vector<16x128xbf16>
    %c1_152 = arith.constant 1 : index
    %c0_153 = arith.constant 0 : index
    %c0_154 = arith.constant 0 : index
    %399 = vector.load %arg11[%c1_152, %c0_153, %c0_154] : memref<2x128x32xbf16, #tpu.memory_space<vmem>>, vector<1x128x32xbf16>
    %400 = vector.shape_cast %399 : vector<1x128x32xbf16> to vector<128x32xbf16>
    %cst_155 = arith.constant dense<0.000000e+00> : vector<16x32xf32>
    %401 = tpu.matmul %398, %400, %cst_155 {dimension_numbers = #tpu.dot_dimension_numbers<[1], [0], [0], [1], [0, 0, 1, 1], [], []>} : vector<16x128xbf16>, vector<128x32xbf16>, vector<16x32xf32> -> vector<16x32xf32>
    %402 = arith.addf %352, %401 : vector<16x32xf32>
    %c1_156 = arith.constant 1 : index
    %c0_157 = arith.constant 0 : index
    %c0_158 = arith.constant 0 : index
    %403 = vector.load %arg12[%c1_156, %c0_157, %c0_158] : memref<2x1x32xf32, #tpu.memory_space<vmem>>, vector<1x1x32xf32>
    %404 = vector.shape_cast %403 : vector<1x1x32xf32> to vector<1x32xf32>
    %405 = vector.broadcast %404 : vector<1x32xf32> to vector<16x32xf32>
    %406 = arith.addf %402, %405 : vector<16x32xf32>
    %c0_159 = arith.constant 0 : index
    %c0_160 = arith.constant 0 : index
    %407 = vector.load %arg13[%c0_159, %c0_160] : memref<1x32xf32, #tpu.memory_space<vmem>>, vector<1x32xf32>
    %c0_161 = arith.constant 0 : index
    %c0_162 = arith.constant 0 : index
    %408 = vector.load %arg14[%c0_161, %c0_162] : memref<1x32xf32, #tpu.memory_space<vmem>>, vector<1x32xf32>
    %cst_163 = arith.constant dense<0.000000e+00> : vector<16xf32>
    %409 = vector.multi_reduction <add>, %406, %cst_163 [1] : vector<16x32xf32> to vector<16xf32>
    %410 = vector.shape_cast %409 : vector<16xf32> to vector<16x1xf32>
    %cst_164 = arith.constant 3.200000e+01 : f32
    %411 = vector.broadcast %cst_164 : f32 to vector<16x1xf32>
    %412 = arith.divf %410, %411 : vector<16x1xf32>
    %413 = vector.broadcast %412 : vector<16x1xf32> to vector<16x32xf32>
    %414 = arith.subf %406, %413 : vector<16x32xf32>
    %415 = arith.mulf %414, %414 : vector<16x32xf32>
    %cst_165 = arith.constant dense<0.000000e+00> : vector<16xf32>
    %416 = vector.multi_reduction <add>, %415, %cst_165 [1] : vector<16x32xf32> to vector<16xf32>
    %417 = vector.shape_cast %416 : vector<16xf32> to vector<16x1xf32>
    %cst_166 = arith.constant 3.200000e+01 : f32
    %418 = vector.broadcast %cst_166 : f32 to vector<16x1xf32>
    %419 = arith.divf %417, %418 : vector<16x1xf32>
    %cst_167 = arith.constant 9.99999974E-6 : f32
    %420 = vector.broadcast %cst_167 : f32 to vector<16x1xf32>
    %421 = arith.addf %419, %420 : vector<16x1xf32>
    %422 = math.rsqrt %421 : vector<16x1xf32>
    %423 = vector.broadcast %422 : vector<16x1xf32> to vector<16x32xf32>
    %424 = arith.mulf %414, %423 : vector<16x32xf32>
    %425 = vector.broadcast %407 : vector<1x32xf32> to vector<16x32xf32>
    %426 = arith.mulf %424, %425 : vector<16x32xf32>
    %427 = vector.broadcast %408 : vector<1x32xf32> to vector<16x32xf32>
    %428 = arith.addf %426, %427 : vector<16x32xf32>
    %429 = arith.truncf %428 : vector<16x32xf32> to vector<16x32xbf16>
    %c0_168 = arith.constant 0 : index
    %c0_169 = arith.constant 0 : index
    %430 = vector.load %arg15[%c0_168, %c0_169] : memref<32x256xbf16, #tpu.memory_space<vmem>>, vector<32x256xbf16>
    %cst_170 = arith.constant dense<0.000000e+00> : vector<16x256xf32>
    %431 = tpu.matmul %429, %430, %cst_170 {dimension_numbers = #tpu.dot_dimension_numbers<[1], [0], [0], [1], [0, 0, 1, 1], [], []>} : vector<16x32xbf16>, vector<32x256xbf16>, vector<16x256xf32> -> vector<16x256xf32>
    %c0_171 = arith.constant 0 : index
    %c0_172 = arith.constant 0 : index
    %432 = vector.load %arg16[%c0_171, %c0_172] : memref<16x256xf32, #tpu.memory_space<vmem>>, vector<16x256xf32>
    tpu.vector_store %arg16[%c0_171, %c0_172], %431 {strides = array<i32>} : memref<16x256xf32, #tpu.memory_space<vmem>>, vector<16x256xf32>,
    return
  }
}

</mosaic_0001>

<llo_original>
// kernel: gpt_forward.1
$region0: #{gpt_forward.1}
  #allocation0 [shape = 'u32[]', space=smem, size = 0x4, offset = 0x4, fixed_abs, tag = 'smem constant byte address 0x4 - core index']
  #allocation1 [shape = 'u32[72,128]{1,0:T(1,128)}', space=vmem, size = 0x9000, scoped, tag = 'internal scratch']
  %s0 = inlined_call_operand.vmem [shape: f32[16,32], index: 0, kind: input, shape index: {}]
  %s1 = inlined_call_operand.vmem [shape: f32[2,1,32], index: 1, kind: input, shape index: {}]
  %s2 = inlined_call_operand.vmem [shape: f32[2,1,32], index: 2, kind: input, shape index: {}]
  %s3 = inlined_call_operand.vmem [shape: bf16[2,32,96], index: 3, kind: input, shape index: {}]
  %s4 = inlined_call_operand.vmem [shape: f32[2,1,96], index: 4, kind: input, shape index: {}]
  %s5 = inlined_call_operand.vmem [shape: bf16[2,32,32], index: 5, kind: input, shape index: {}]
  %s6 = inlined_call_operand.vmem [shape: f32[2,1,32], index: 6, kind: input, shape index: {}]
  %s7 = inlined_call_operand.vmem [shape: f32[2,1,32], index: 7, kind: input, shape index: {}]
  %s8 = inlined_call_operand.vmem [shape: f32[2,1,32], index: 8, kind: input, shape index: {}]
  %s9 = inlined_call_operand.vmem [shape: bf16[2,32,128], index: 9, kind: input, shape index: {}]
  %s10 = inlined_call_operand.vmem [shape: f32[2,1,128], index: 10, kind: input, shape index: {}]
  %s11 = inlined_call_operand.vmem [shape: bf16[2,128,32], index: 11, kind: input, shape index: {}]
  %s12 = inlined_call_operand.vmem [shape: f32[2,1,32], index: 12, kind: input, shape index: {}]
  %s13 = inlined_call_operand.vmem [shape: f32[1,32], index: 13, kind: input, shape index: {}]
  %s14 = inlined_call_operand.vmem [shape: f32[1,32], index: 14, kind: input, shape index: {}]
  %s15 = inlined_call_operand.vmem [shape: bf16[32,256], index: 15, kind: input, shape index: {}]
  %s16 = inlined_call_operand.hbm [shape: f32[16,256], index: 16, kind: output, shape index: {}]
  %s17 = sld [smem:[#allocation0]]
  $region74: #{gpt_forward.1} parent=0
    _
  %s19 = ssub.s32 1, %s17
  %s20 = scalar_select 0, %s19, %s17
  $region1: #{gpt_forward.1} parent=0
    #allocation2 [shape = 'u8[16384]{0}', space=vmem, size = 0x4000, scoped, tag = 'output window, operand 0, single buffered']
    #allocation3 [shape = 's32[1]{0}', space=sflag, size = 0x4, scoped, tag = 'scoped memory for gpt_forward.1']
    %21 = vsyncpa [#allocation3], 0
    // Predicated region
    $region2: #{gpt_forward.1} parent=1 // pred_check
      _
    $region3: #{gpt_forward.1} parent=1 // pred_check_branch
      %23 = sbr.rel (0) target = $region5
    $region4: #{gpt_forward.1} parent=1 // pred_region
      _
    $region5: #{gpt_forward.1} parent=1 // pred_fallthru
      _
    // Predicated region
    $region6: #{gpt_forward.1} parent=1 // pred_check
      _
    $region7: #{gpt_forward.1} parent=1 // pred_check_branch
      %25 = sbr.rel (0) target = $region9
    $region8: #{gpt_forward.1} parent=1 // pred_region
      _
    $region9: #{gpt_forward.1} parent=1 // pred_fallthru
      _
    // Predicated region
    $region10: #{gpt_forward.1} parent=1 // pred_check
      _
    $region11: #{gpt_forward.1} parent=1 // pred_check_branch
      %27 = sbr.rel (0) target = $region13
    $region12: #{gpt_forward.1} parent=1 // pred_region
      _
    $region13: #{gpt_forward.1} parent=1 // pred_fallthru
      _
    // Predicated region
    $region14: #{gpt_forward.1} parent=1 // pred_check
      _
    $region15: #{gpt_forward.1} parent=1 // pred_check_branch
      %29 = sbr.rel (0) target = $region17
    $region16: #{gpt_forward.1} parent=1 // pred_region
      _
    $region17: #{gpt_forward.1} parent=1 // pred_fallthru
      _
    // Predicated region
    $region18: #{gpt_forward.1} parent=1 // pred_check
      _
    $region19: #{gpt_forward.1} parent=1 // pred_check_branch
      %31 = sbr.rel (0) target = $region21
    $region20: #{gpt_forward.1} parent=1 // pred_region
      _
    $region21: #{gpt_forward.1} parent=1 // pred_fallthru
      _
    // Predicated region
    $region22: #{gpt_forward.1} parent=1 // pred_check
      _
    $region23: #{gpt_forward.1} parent=1 // pred_check_branch
      %33 = sbr.rel (0) target = $region25
    $region24: #{gpt_forward.1} parent=1 // pred_region
      _
    $region25: #{gpt_forward.1} parent=1 // pred_fallthru
      _
    // Predicated region
    $region26: #{gpt_forward.1} parent=1 // pred_check
      _
    $region27: #{gpt_forward.1} parent=1 // pred_check_branch
      %35 = sbr.rel (0) target = $region29
    $region28: #{gpt_forward.1} parent=1 // pred_region
      _
    $region29: #{gpt_forward.1} parent=1 // pred_fallthru
      _
    // Predicated region
    $region30: #{gpt_forward.1} parent=1 // pred_check
      _
    $region31: #{gpt_forward.1} parent=1 // pred_check_branch
      %37 = sbr.rel (0) target = $region33
    $region32: #{gpt_forward.1} parent=1 // pred_region
      _
    $region33: #{gpt_forward.1} parent=1 // pred_fallthru
      _
    // Predicated region
    $region34: #{gpt_forward.1} parent=1 // pred_check
      _
    $region35: #{gpt_forward.1} parent=1 // pred_check_branch
      %39 = sbr.rel (0) target = $region37
    $region36: #{gpt_forward.1} parent=1 // pred_region
      _
    $region37: #{gpt_forward.1} parent=1 // pred_fallthru
      _
    // Predicated region
    $region38: #{gpt_forward.1} parent=1 // pred_check
      _
    $region39: #{gpt_forward.1} parent=1 // pred_check_branch
      %41 = sbr.rel (0) target = $region41
    $region40: #{gpt_forward.1} parent=1 // pred_region
      _
    $region41: #{gpt_forward.1} parent=1 // pred_fallthru
      _
    // Predicated region
    $region42: #{gpt_forward.1} parent=1 // pred_check
      _
    $region43: #{gpt_forward.1} parent=1 // pred_check_branch
      %43 = sbr.rel (0) target = $region45
    $region44: #{gpt_forward.1} parent=1 // pred_region
      _
    $region45: #{gpt_forward.1} parent=1 // pred_fallthru
      _
    // Predicated region
    $region46: #{gpt_forward.1} parent=1 // pred_check
      _
    $region47: #{gpt_forward.1} parent=1 // pred_check_branch
      %45 = sbr.rel (0) target = $region49
    $region48: #{gpt_forward.1} parent=1 // pred_region
      _
    $region49: #{gpt_forward.1} parent=1 // pred_fallthru
      _
    // Predicated region
    $region50: #{gpt_forward.1} parent=1 // pred_check
      _
    $region51: #{gpt_forward.1} parent=1 // pred_check_branch
      %47 = sbr.rel (0) target = $region53
    $region52: #{gpt_forward.1} parent=1 // pred_region
      _
    $region53: #{gpt_forward.1} parent=1 // pred_fallthru
      _
    // Predicated region
    $region54: #{gpt_forward.1} parent=1 // pred_check
      _
    $region55: #{gpt_forward.1} parent=1 // pred_check_branch
      %49 = sbr.rel (0) target = $region57
    $region56: #{gpt_forward.1} parent=1 // pred_region
      _
    $region57: #{gpt_forward.1} parent=1 // pred_fallthru
      _
    // Predicated region
    $region58: #{gpt_forward.1} parent=1 // pred_check
      _
    $region59: #{gpt_forward.1} parent=1 // pred_check_branch
      %51 = sbr.rel (0) target = $region61
    $region60: #{gpt_forward.1} parent=1 // pred_region
      _
    $region61: #{gpt_forward.1} parent=1 // pred_fallthru
      _
    // Predicated region
    $region62: #{gpt_forward.1} parent=1 // pred_check
      _
    $region63: #{gpt_forward.1} parent=1 // pred_check_branch
      %53 = sbr.rel (0) target = $region65
    $region64: #{gpt_forward.1} parent=1 // pred_region
      _
    $region65: #{gpt_forward.1} parent=1 // pred_fallthru
      _
    %v55 = vld [vmem:[%s0] sm:$0xff]
    %v56 = vld [vmem:[%s0 + $0x8] sm:$0xff]
    %v57 = vlaneseq
    %v58 = vshrl.u32 %v57, 7
    %v59 = vlaneseq
    %v60 = vand.u32 %v59, 127
    %vm61 = vcmp.le.s32.totalorder %v60, %v58
    %v62 = vsel %vm61, 0.0, -1e+30
    %v63 = vld [vmem:[%s1] sm:$0x1]
    %v64 = vld [vmem:[%s2] sm:$0x1]
    %vm65 = vcmask 261120
    %v66 = vsel %vm65, %v55, 0.0
    %67 = vadd.xlane.f32.xlu0 %v66
    %v68 = vpop.xlane.xlu0 %67
    %v69 = vsel %vm65, %v56, 0.0
    %70 = vadd.xlane.f32.xlu0 %v69
    %v71 = vpop.xlane.xlu0 %70
    %v72 = vrcp.pop 32.0
    %v73 = vmul.f32 32.0, %v72
    %v74 = vsub.f32 1.0, %v73
    %v75 = vmul.f32 %v72, %v74
    %v76 = vadd.f32 %v72, %v75
    %vm77 = vweird.f32 %v72
    %v78 = vsel %vm77, %v72, %v76
    %v79 = vmul.f32 %v68, %v78
    %v80 = vmul.f32 %v71, %v78
    %v81 = vsub.f32 %v55, %v79
    %v82 = vsub.f32 %v56, %v80
    %v83 = vmul.f32 %v81, %v81
    %v84 = vmul.f32 %v82, %v82
    %v85 = vsel %vm65, %v83, 0.0
    %86 = vadd.xlane.f32.xlu0 %v85
    %v87 = vpop.xlane.xlu0 %86
    %v88 = vsel %vm65, %v84, 0.0
    %89 = vadd.xlane.f32.xlu0 %v88
    %v90 = vpop.xlane.xlu0 %89
    %v91 = vmul.f32 %v87, %v78
    %v92 = vmul.f32 %v90, %v78
    %v93 = vadd.f32 %v91, 1e-05
    %v94 = vadd.f32 %v92, 1e-05
    %v95 = vrsqrt.pop %v93
    %v96 = vmul.f32 %v95, %v93
    %v97 = vmul.f32 %v96, %v95
    %v98 = vmul.f32 0.5, %v97
    %v99 = vsub.f32 1.5, %v98
    %v100 = vmul.f32 %v95, %v99
    %vm101 = vweird.f32 %v93
    %vm102 = vweird.f32 %v95
    %vm103 = vmor %vm101, %vm102
    %v104 = vsel %vm103, %v95, %v100
    %v105 = vrsqrt.pop %v94
    %v106 = vmul.f32 %v105, %v94
    %v107 = vmul.f32 %v106, %v105
    %v108 = vmul.f32 0.5, %v107
    %v109 = vsub.f32 1.5, %v108
    %v110 = vmul.f32 %v105, %v109
    %vm111 = vweird.f32 %v94
    %vm112 = vweird.f32 %v105
    %vm113 = vmor %vm111, %vm112
    %v114 = vsel %vm113, %v105, %v110
    %v115 = vmul.f32 %v81, %v104
    %v116 = vmul.f32 %v82, %v114
    %v118 = vperm.slane %v63, 0
    %v120 = vmul.f32 %v115, %v118
    %v121 = vmul.f32 %v116, %v118
    %v123 = vperm.slane %v64, 0
    %v125 = vadd.f32 %v120, %v123
    %v126 = vadd.f32 %v121, %v123
    %v127 = vpack.c.bf16 %v126, %v125
    %v128 = vld [vmem:[%s3] sm:$0xf]
    %v129 = vld [vmem:[%s3 + $0x4] sm:$0xf]
    %v130 = vld [vmem:[%s3 + $0x8] sm:$0xf]
    %v131 = vld [vmem:[%s3 + $0xc] sm:$0xf]
    %v132 = vld [vmem:[%s4] sm:$0x1]
    %v134 = vperm.slane %v132, 0
    %v140 = vunpack.c.l.b16 %v128
    %v141 = vunpack.c.l.b16 %v129
    %v142 = vunpack.c.l.b16 %v130
    %v143 = vunpack.c.l.b16 %v131
    %v144 = vpack.c.b16 %v141, %v140
    %v145 = vpack.c.b16 %v143, %v142
    %v149 = vsel %vm65, %v127, 0
    %151 = vmatpush.bf16.msra.mxu0 0
    %152 = vmatpush.bf16.msra.mxu0 0
    %153 = vmatpush.bf16.msra.mxu0 0
    %154 = vmatpush.bf16.msra.mxu0 0
    %155 = vmatpush.bf16.msra.mxu0 0
    %156 = vmatpush.bf16.msra.mxu0 0
    %157 = vmatpush.bf16.msra.mxu0 %v145
    %158 = vmatpush.bf16.msra.mxu0 %v144
    %159 = vmatmul.bf16.gmra.mxu0 %v149
    %v160 = vpop.f32.mrf.mxu0
    %v161 = vadd.f32 %v134, %v160
    %v162 = vpop.f32.mrf.mxu0
    %v163 = vadd.f32 %v134, %v162
    %164 = vdwg.mxu0
    %v165 = vld [vmem:[%s5] sm:$0xf]
    %v166 = vld [vmem:[%s5 + $0x4] sm:$0xf]
    %v167 = vld [vmem:[%s5 + $0x8] sm:$0xf]
    %v168 = vld [vmem:[%s5 + $0xc] sm:$0xf]
    %v169 = vpack.c.bf16 %v161, %v161
    %171 = vrot.lane.b32.xlu0 %v169, 96
    %v172 = vpop.permute.xlu0 %171
    %vm173 = vcmask 130048
    %v175 = vsel %vm173, %v169, 0
    %v178 = vsel %vm173, %v172, 0
    %180 = vmatpush.bf16.xpose.msra.mxu0 0
    %181 = vmatpush.bf16.xpose.msra.mxu0 0
    %182 = vmatpush.bf16.xpose.msra.mxu0 0
    %183 = vmatpush.bf16.xpose.msra.mxu0 0
    %184 = vmatpush.bf16.xpose.msra.mxu0 0
    %185 = vmatpush.bf16.xpose.msra.mxu0 0
    %186 = vmatpush.bf16.xpose.msra.mxu0 0
    %187 = vmatpush.bf16.xpose.msra.mxu0 %v178
    %188 = vmatmul.bf16.gmra.mxu0 %v175
    %v189 = vpop.f32.mrf.mxu0
    %v190 = vadd.f32 0.0, %v189
    %v191 = vpop.f32.mrf.mxu0
    %192 = vdwg.mxu0
    %v193 = vmul.f32 %v190, 0.25
    %v194 = vadd.f32 %v193, %v62
    %vm195 = vcmask 64512
    %v196 = vsel %vm195, %v194, -inf
    %197 = vmax.xlane.f32.xlu0 %v196
    %v198 = vpop.xlane.xlu0 %197
    %v199 = vsub.f32 %v194, %v198
    %v200 = vmul.f32 %v199, 1.442695
    %v201 = vpow.pop %v200
    %v202 = vsel %vm195, %v201, 0.0
    %203 = vadd.xlane.f32.xlu0 %v202
    %v204 = vpop.xlane.xlu0 %203
    %v205 = vrcp.pop %v204
    %v206 = vmul.f32 %v201, %v205
    %v207 = vpack.c.bf16 %v206, %v206
    %208 = vrot.lane.b32.xlu0 %v169, 64
    %v209 = vpop.permute.xlu0 %208
    %v211 = vsel %vm195, %v207, 0
    %vm213 = vcmask 1043456
    %v215 = vsel %vm213, %v209, 0
    %217 = vmatpush.bf16.msra.mxu0 0
    %218 = vmatpush.bf16.msra.mxu0 0
    %219 = vmatpush.bf16.msra.mxu0 0
    %220 = vmatpush.bf16.msra.mxu0 0
    %221 = vmatpush.bf16.msra.mxu0 0
    %222 = vmatpush.bf16.msra.mxu0 0
    %223 = vmatpush.bf16.msra.mxu0 0
    %224 = vmatpush.bf16.msra.mxu0 %v215
    %225 = vmatmul.bf16.gmra.mxu0 %v211
    %v226 = vpop.f32.mrf.mxu0
    %v227 = vadd.f32 0.0, %v226
    %v228 = vpop.f32.mrf.mxu0
    %229 = vdwg.mxu0
    %v230 = vpack.c.bf16 %v227, %v227
    %231 = vrot.lane.b32.xlu0 %v169, 112
    %v232 = vpop.permute.xlu0 %231
    %233 = vrot.lane.b32.xlu0 %v169, 80
    %v234 = vpop.permute.xlu0 %233
    %v236 = vsel %vm173, %v232, 0
    %v239 = vsel %vm173, %v234, 0
    %241 = vmatpush.bf16.xpose.msra.mxu0 0
    %242 = vmatpush.bf16.xpose.msra.mxu0 0
    %243 = vmatpush.bf16.xpose.msra.mxu0 0
    %244 = vmatpush.bf16.xpose.msra.mxu0 0
    %245 = vmatpush.bf16.xpose.msra.mxu0 0
    %246 = vmatpush.bf16.xpose.msra.mxu0 0
    %247 = vmatpush.bf16.xpose.msra.mxu0 0
    %248 = vmatpush.bf16.xpose.msra.mxu0 %v239
    %249 = vmatmul.bf16.gmra.mxu0 %v236
    %v250 = vpop.f32.mrf.mxu0
    %v251 = vadd.f32 0.0, %v250
    %v252 = vpop.f32.mrf.mxu0
    %253 = vdwg.mxu0
    %v254 = vmul.f32 %v251, 0.25
    %v255 = vadd.f32 %v254, %v62
    %v256 = vsel %vm195, %v255, -inf
    %257 = vmax.xlane.f32.xlu0 %v256
    %v258 = vpop.xlane.xlu0 %257
    %v259 = vsub.f32 %v255, %v258
    %v260 = vmul.f32 %v259, 1.442695
    %v261 = vpow.pop %v260
    %v262 = vsel %vm195, %v261, 0.0
    %263 = vadd.xlane.f32.xlu0 %v262
    %v264 = vpop.xlane.xlu0 %263
    %v265 = vrcp.pop %v264
    %v266 = vmul.f32 %v261, %v265
    %v267 = vpack.c.bf16 %v266, %v266
    %268 = vrot.lane.b32.xlu0 %v169, 48
    %v269 = vpop.permute.xlu0 %268
    %v271 = vsel %vm195, %v267, 0
    %v274 = vsel %vm213, %v269, 0
    %276 = vmatpush.bf16.msra.mxu0 0
    %277 = vmatpush.bf16.msra.mxu0 0
    %278 = vmatpush.bf16.msra.mxu0 0
    %279 = vmatpush.bf16.msra.mxu0 0
    %280 = vmatpush.bf16.msra.mxu0 0
    %281 = vmatpush.bf16.msra.mxu0 0
    %282 = vmatpush.bf16.msra.mxu0 0
    %283 = vmatpush.bf16.msra.mxu0 %v274
    %284 = vmatmul.bf16.gmra.mxu0 %v271
    %v285 = vpop.f32.mrf.mxu0
    %v286 = vadd.f32 0.0, %v285
    %v287 = vpop.f32.mrf.mxu0
    %288 = vdwg.mxu0
    %v289 = vpack.c.bf16 %v286, %v286
    %v292 = vunpack.c.l.b16 %v167
    %v293 = vunpack.c.l.b16 %v168
    %v294 = vpack.c.b16 %v293, %v292
    %v297 = vsel %vm173, %v289, 0
    %299 = vmatpush.bf16.msra.mxu0 0
    %300 = vmatpush.bf16.msra.mxu0 0
    %301 = vmatpush.bf16.msra.mxu0 0
    %302 = vmatpush.bf16.msra.mxu0 0
    %303 = vmatpush.bf16.msra.mxu0 0
    %304 = vmatpush.bf16.msra.mxu0 0
    %305 = vmatpush.bf16.msra.mxu0 0
    %306 = vmatpush.bf16.msra.mxu0 %v294
    %307 = vmatmul.bf16.gmra.mxu0 %v297
    %v308 = vpop.f32.mrf.mxu0
    %v309 = vadd.f32 0.0, %v308
    %v310 = vpop.f32.mrf.mxu0
    %311 = vdwg.mxu0
    %v314 = vunpack.c.l.b16 %v165
    %v315 = vunpack.c.l.b16 %v166
    %v316 = vpack.c.b16 %v315, %v314
    %v319 = vsel %vm173, %v230, 0
    %321 = vmatpush.bf16.msra.mxu0 0
    %322 = vmatpush.bf16.msra.mxu0 0
    %323 = vmatpush.bf16.msra.mxu0 0
    %324 = vmatpush.bf16.msra.mxu0 0
    %325 = vmatpush.bf16.msra.mxu0 0
    %326 = vmatpush.bf16.msra.mxu0 0
    %327 = vmatpush.bf16.msra.mxu0 0
    %328 = vmatpush.bf16.msra.mxu0 %v316
    %329 = vmatmul.bf16.gmra.mxu0 %v319
    %v330 = vpop.f32.mrf.mxu0
    %v331 = vadd.f32 %v309, %v330
    %v332 = vpop.f32.mrf.mxu0
    %333 = vdwg.mxu0
    %v334 = vpack.c.bf16 %v163, %v163
    %336 = vrot.lane.b32.xlu0 %v334, 96
    %v337 = vpop.permute.xlu0 %336
    %v339 = vsel %vm173, %v334, 0
    %v342 = vsel %vm173, %v337, 0
    %344 = vmatpush.bf16.xpose.msra.mxu0 0
    %345 = vmatpush.bf16.xpose.msra.mxu0 0
    %346 = vmatpush.bf16.xpose.msra.mxu0 0
    %347 = vmatpush.bf16.xpose.msra.mxu0 0
    %348 = vmatpush.bf16.xpose.msra.mxu0 0
    %349 = vmatpush.bf16.xpose.msra.mxu0 0
    %350 = vmatpush.bf16.xpose.msra.mxu0 0
    %351 = vmatpush.bf16.xpose.msra.mxu0 %v342
    %352 = vmatmul.bf16.gmra.mxu0 %v339
    %v353 = vpop.f32.mrf.mxu0
    %v354 = vadd.f32 0.0, %v353
    %v355 = vpop.f32.mrf.mxu0
    %356 = vdwg.mxu0
    %v357 = vmul.f32 %v354, 0.25
    %v358 = vadd.f32 %v357, %v62
    %v359 = vsel %vm195, %v358, -inf
    %360 = vmax.xlane.f32.xlu0 %v359
    %v361 = vpop.xlane.xlu0 %360
    %v362 = vsub.f32 %v358, %v361
    %v363 = vmul.f32 %v362, 1.442695
    %v364 = vpow.pop %v363
    %v365 = vsel %vm195, %v364, 0.0
    %366 = vadd.xlane.f32.xlu0 %v365
    %v367 = vpop.xlane.xlu0 %366
    %v368 = vrcp.pop %v367
    %v369 = vmul.f32 %v364, %v368
    %v370 = vpack.c.bf16 %v369, %v369
    %371 = vrot.lane.b32.xlu0 %v334, 64
    %v372 = vpop.permute.xlu0 %371
    %v374 = vsel %vm195, %v370, 0
    %v377 = vsel %vm213, %v372, 0
    %379 = vmatpush.bf16.msra.mxu0 0
    %380 = vmatpush.bf16.msra.mxu0 0
    %381 = vmatpush.bf16.msra.mxu0 0
    %382 = vmatpush.bf16.msra.mxu0 0
    %383 = vmatpush.bf16.msra.mxu0 0
    %384 = vmatpush.bf16.msra.mxu0 0
    %385 = vmatpush.bf16.msra.mxu0 0
    %386 = vmatpush.bf16.msra.mxu0 %v377
    %387 = vmatmul.bf16.gmra.mxu0 %v374
    %v388 = vpop.f32.mrf.mxu0
    %v389 = vadd.f32 0.0, %v388
    %v390 = vpop.f32.mrf.mxu0
    %391 = vdwg.mxu0
    %v392 = vpack.c.bf16 %v389, %v389
    %393 = vrot.lane.b32.xlu0 %v334, 112
    %v394 = vpop.permute.xlu0 %393
    %395 = vrot.lane.b32.xlu0 %v334, 80
    %v396 = vpop.permute.xlu0 %395
    %v398 = vsel %vm173, %v394, 0
    %v401 = vsel %vm173, %v396, 0
    %403 = vmatpush.bf16.xpose.msra.mxu0 0
    %404 = vmatpush.bf16.xpose.msra.mxu0 0
    %405 = vmatpush.bf16.xpose.msra.mxu0 0
    %406 = vmatpush.bf16.xpose.msra.mxu0 0
    %407 = vmatpush.bf16.xpose.msra.mxu0 0
    %408 = vmatpush.bf16.xpose.msra.mxu0 0
    %409 = vmatpush.bf16.xpose.msra.mxu0 0
    %410 = vmatpush.bf16.xpose.msra.mxu0 %v401
    %411 = vmatmul.bf16.gmra.mxu0 %v398
    %v412 = vpop.f32.mrf.mxu0
    %v413 = vadd.f32 0.0, %v412
    %v414 = vpop.f32.mrf.mxu0
    %415 = vdwg.mxu0
    %v416 = vmul.f32 %v413, 0.25
    %v417 = vadd.f32 %v416, %v62
    %v418 = vsel %vm195, %v417, -inf
    %419 = vmax.xlane.f32.xlu0 %v418
    %v420 = vpop.xlane.xlu0 %419
    %v421 = vsub.f32 %v417, %v420
    %v422 = vmul.f32 %v421, 1.442695
    %v423 = vpow.pop %v422
    %v424 = vsel %vm195, %v423, 0.0
    %425 = vadd.xlane.f32.xlu0 %v424
    %v426 = vpop.xlane.xlu0 %425
    %v427 = vrcp.pop %v426
    %v428 = vmul.f32 %v423, %v427
    %v429 = vpack.c.bf16 %v428, %v428
    %430 = vrot.lane.b32.xlu0 %v334, 48
    %v431 = vpop.permute.xlu0 %430
    %v433 = vsel %vm195, %v429, 0
    %v436 = vsel %vm213, %v431, 0
    %438 = vmatpush.bf16.msra.mxu0 0
    %439 = vmatpush.bf16.msra.mxu0 0
    %440 = vmatpush.bf16.msra.mxu0 0
    %441 = vmatpush.bf16.msra.mxu0 0
    %442 = vmatpush.bf16.msra.mxu0 0
    %443 = vmatpush.bf16.msra.mxu0 0
    %444 = vmatpush.bf16.msra.mxu0 0
    %445 = vmatpush.bf16.msra.mxu0 %v436
    %446 = vmatmul.bf16.gmra.mxu0 %v433
    %v447 = vpop.f32.mrf.mxu0
    %v448 = vadd.f32 0.0, %v447
    %v449 = vpop.f32.mrf.mxu0
    %450 = vdwg.mxu0
    %v451 = vpack.c.bf16 %v448, %v448
    %v453 = vsel %vm173, %v451, 0
    %455 = vmatpush.bf16.msra.mxu0 0
    %456 = vmatpush.bf16.msra.mxu0 0
    %457 = vmatpush.bf16.msra.mxu0 0
    %458 = vmatpush.bf16.msra.mxu0 0
    %459 = vmatpush.bf16.msra.mxu0 0
    %460 = vmatpush.bf16.msra.mxu0 0
    %461 = vmatpush.bf16.msra.mxu0 0
    %462 = vmatpush.bf16.msra.mxu0 %v294
    %463 = vmatmul.bf16.gmra.mxu0 %v453
    %v464 = vpop.f32.mrf.mxu0
    %v465 = vadd.f32 0.0, %v464
    %v466 = vpop.f32.mrf.mxu0
    %467 = vdwg.mxu0
    %v469 = vsel %vm173, %v392, 0
    %471 = vmatpush.bf16.msra.mxu0 0
    %472 = vmatpush.bf16.msra.mxu0 0
    %473 = vmatpush.bf16.msra.mxu0 0
    %474 = vmatpush.bf16.msra.mxu0 0
    %475 = vmatpush.bf16.msra.mxu0 0
    %476 = vmatpush.bf16.msra.mxu0 0
    %477 = vmatpush.bf16.msra.mxu0 0
    %478 = vmatpush.bf16.msra.mxu0 %v316
    %479 = vmatmul.bf16.gmra.mxu0 %v469
    %v480 = vpop.f32.mrf.mxu0
    %v481 = vadd.f32 %v465, %v480
    %v482 = vpop.f32.mrf.mxu0
    %483 = vdwg.mxu0
    %v484 = vld [vmem:[%s6] sm:$0x1]
    %v486 = vperm.slane %v484, 0
    %v488 = vadd.f32 %v331, %v486
    %v489 = vadd.f32 %v481, %v486
    %v490 = vadd.f32 %v55, %v488
    %v491 = vadd.f32 %v56, %v489
    %v492 = vld [vmem:[%s7] sm:$0x1]
    %v493 = vld [vmem:[%s8] sm:$0x1]
    %v494 = vsel %vm65, %v490, 0.0
    %495 = vadd.xlane.f32.xlu0 %v494
    %v496 = vpop.xlane.xlu0 %495
    %v497 = vsel %vm65, %v491, 0.0
    %498 = vadd.xlane.f32.xlu0 %v497
    %v499 = vpop.xlane.xlu0 %498
    %v500 = vmul.f32 %v496, %v78
    %v501 = vmul.f32 %v499, %v78
    %v502 = vsub.f32 %v490, %v500
    %v503 = vsub.f32 %v491, %v501
    %v504 = vmul.f32 %v502, %v502
    %v505 = vmul.f32 %v503, %v503
    %v506 = vsel %vm65, %v504, 0.0
    %507 = vadd.xlane.f32.xlu0 %v506
    %v508 = vpop.xlane.xlu0 %507
    %v509 = vsel %vm65, %v505, 0.0
    %510 = vadd.xlane.f32.xlu0 %v509
    %v511 = vpop.xlane.xlu0 %510
    %v512 = vmul.f32 %v508, %v78
    %v513 = vmul.f32 %v511, %v78
    %v514 = vadd.f32 %v512, 1e-05
    %v515 = vadd.f32 %v513, 1e-05
    %v516 = vrsqrt.pop %v514
    %v517 = vmul.f32 %v516, %v514
    %v518 = vmul.f32 %v517, %v516
    %v519 = vmul.f32 0.5, %v518
    %v520 = vsub.f32 1.5, %v519
    %v521 = vmul.f32 %v516, %v520
    %vm522 = vweird.f32 %v514
    %vm523 = vweird.f32 %v516
    %vm524 = vmor %vm522, %vm523
    %v525 = vsel %vm524, %v516, %v521
    %v526 = vrsqrt.pop %v515
    %v527 = vmul.f32 %v526, %v515
    %v528 = vmul.f32 %v527, %v526
    %v529 = vmul.f32 0.5, %v528
    %v530 = vsub.f32 1.5, %v529
    %v531 = vmul.f32 %v526, %v530
    %vm532 = vweird.f32 %v515
    %vm533 = vweird.f32 %v526
    %vm534 = vmor %vm532, %vm533
    %v535 = vsel %vm534, %v526, %v531
    %v536 = vmul.f32 %v502, %v525
    %v537 = vmul.f32 %v503, %v535
    %v539 = vperm.slane %v492, 0
    %v541 = vmul.f32 %v536, %v539
    %v542 = vmul.f32 %v537, %v539
    %v544 = vperm.slane %v493, 0
    %v546 = vadd.f32 %v541, %v544
    %v547 = vadd.f32 %v542, %v544
    %v548 = vpack.c.bf16 %v547, %v546
    %v549 = vld [vmem:[%s9] sm:$0xf]
    %v550 = vld [vmem:[%s9 + $0x4] sm:$0xf]
    %v551 = vld [vmem:[%s9 + $0x8] sm:$0xf]
    %v552 = vld [vmem:[%s9 + $0xc] sm:$0xf]
    %v553 = vld [vmem:[%s10] sm:$0x1]
    %v555 = vperm.slane %v553, 0
    %v561 = vunpack.c.l.b16 %v549
    %v562 = vunpack.c.l.b16 %v550
    %v563 = vunpack.c.l.b16 %v551
    %v564 = vunpack.c.l.b16 %v552
    %v565 = vpack.c.b16 %v562, %v561
    %v566 = vpack.c.b16 %v564, %v563
    %v570 = vsel %vm65, %v548, 0
    %572 = vmatpush.bf16.msra.mxu0 0
    %573 = vmatpush.bf16.msra.mxu0 0
    %574 = vmatpush.bf16.msra.mxu0 0
    %575 = vmatpush.bf16.msra.mxu0 0
    %576 = vmatpush.bf16.msra.mxu0 0
    %577 = vmatpush.bf16.msra.mxu0 0
    %578 = vmatpush.bf16.msra.mxu0 %v566
    %579 = vmatpush.bf16.msra.mxu0 %v565
    %580 = vmatmul.bf16.gmra.mxu0 %v570
    %v581 = vpop.f32.mrf.mxu0
    %v582 = vadd.f32 %v555, %v581
    %v583 = vpop.f32.mrf.mxu0
    %v584 = vadd.f32 %v555, %v583
    %585 = vdwg.mxu0
    %v586 = vmul.f32 %v582, 0.5
    %v587 = vmul.f32 %v584, 0.5
    %v588 = vmul.f32 %v582, 0.044715
    %v589 = vmul.f32 %v584, 0.044715
    %v590 = vmul.f32 %v588, %v582
    %v591 = vmul.f32 %v589, %v584
    %v592 = vmul.f32 %v590, %v582
    %v593 = vmul.f32 %v591, %v584
    %v594 = vadd.f32 %v582, %v592
    %v595 = vadd.f32 %v584, %v593
    %v596 = vmul.f32 %v594, 0.7978846
    %v597 = vmul.f32 %v595, 0.7978846
    %v598 = vtanh.pop %v596
    %v599 = vtanh.pop %v597
    %v600 = vadd.f32 %v598, 1.0
    %v601 = vadd.f32 %v599, 1.0
    %v602 = vmul.f32 %v586, %v600
    %v603 = vmul.f32 %v587, %v601
    %v604 = vpack.c.bf16 %v603, %v602
    %v605 = vld [vmem:[%s11] sm:$0xf]
    %v606 = vld [vmem:[%s11 + $0x4] sm:$0xf]
    %v607 = vld [vmem:[%s11 + $0x8] sm:$0xf]
    %v608 = vld [vmem:[%s11 + $0xc] sm:$0xf]
    %v609 = vld [vmem:[%s11 + $0x10] sm:$0xf]
    %v610 = vld [vmem:[%s11 + $0x14] sm:$0xf]
    %v611 = vld [vmem:[%s11 + $0x18] sm:$0xf]
    %v612 = vld [vmem:[%s11 + $0x1c] sm:$0xf]
    %v613 = vld [vmem:[%s11 + $0x20] sm:$0xf]
    %v614 = vld [vmem:[%s11 + $0x24] sm:$0xf]
    %v615 = vld [vmem:[%s11 + $0x28] sm:$0xf]
    %v616 = vld [vmem:[%s11 + $0x2c] sm:$0xf]
    %v617 = vld [vmem:[%s11 + $0x30] sm:$0xf]
    %v618 = vld [vmem:[%s11 + $0x34] sm:$0xf]
    %v619 = vld [vmem:[%s11 + $0x38] sm:$0xf]
    %v620 = vld [vmem:[%s11 + $0x3c] sm:$0xf]
    %v637 = vunpack.c.l.b16 %v605
    %v638 = vunpack.c.l.b16 %v606
    %v639 = vunpack.c.l.b16 %v607
    %v640 = vunpack.c.l.b16 %v608
    %v641 = vunpack.c.l.b16 %v609
    %v642 = vunpack.c.l.b16 %v610
    %v643 = vunpack.c.l.b16 %v611
    %v644 = vunpack.c.l.b16 %v612
    %v645 = vunpack.c.l.b16 %v613
    %v646 = vunpack.c.l.b16 %v614
    %v647 = vunpack.c.l.b16 %v615
    %v648 = vunpack.c.l.b16 %v616
    %v649 = vunpack.c.l.b16 %v617
    %v650 = vunpack.c.l.b16 %v618
    %v651 = vunpack.c.l.b16 %v619
    %v652 = vunpack.c.l.b16 %v620
    %v653 = vpack.c.b16 %v638, %v637
    %v654 = vpack.c.b16 %v640, %v639
    %v655 = vpack.c.b16 %v642, %v641
    %v656 = vpack.c.b16 %v644, %v643
    %v657 = vpack.c.b16 %v646, %v645
    %v658 = vpack.c.b16 %v648, %v647
    %v659 = vpack.c.b16 %v650, %v649
    %v660 = vpack.c.b16 %v652, %v651
    %669 = vmatpush.bf16.msra.mxu0 %v660
    %670 = vmatpush.bf16.msra.mxu0 %v659
    %671 = vmatpush.bf16.msra.mxu0 %v658
    %672 = vmatpush.bf16.msra.mxu0 %v657
    %673 = vmatpush.bf16.msra.mxu0 %v656
    %674 = vmatpush.bf16.msra.mxu0 %v655
    %675 = vmatpush.bf16.msra.mxu0 %v654
    %676 = vmatpush.bf16.msra.mxu0 %v653
    %677 = vmatmul.bf16.gmra.mxu0 %v604
    %v678 = vpop.f32.mrf.mxu0
    %v679 = vadd.f32 0.0, %v678
    %v680 = vpop.f32.mrf.mxu0
    %v681 = vadd.f32 0.0, %v680
    %682 = vdwg.mxu0
    %v683 = vadd.f32 %v490, %v679
    %v684 = vadd.f32 %v491, %v681
    %v685 = vld [vmem:[%s12] sm:$0x1]
    %v687 = vperm.slane %v685, 0
    %v689 = vadd.f32 %v683, %v687
    %v690 = vadd.f32 %v684, %v687
    %s691 = scalar_lea.vmem %s1, 1
    %v692 = vld [vmem:[%s691] sm:$0x1]
    %s693 = scalar_lea.vmem %s2, 1
    %v694 = vld [vmem:[%s693] sm:$0x1]
    %v695 = vsel %vm65, %v689, 0.0
    %696 = vadd.xlane.f32.xlu0 %v695
    %v697 = vpop.xlane.xlu0 %696
    %v698 = vsel %vm65, %v690, 0.0
    %699 = vadd.xlane.f32.xlu0 %v698
    %v700 = vpop.xlane.xlu0 %699
    %v701 = vmul.f32 %v697, %v78
    %v702 = vmul.f32 %v700, %v78
    %v703 = vsub.f32 %v689, %v701
    %v704 = vsub.f32 %v690, %v702
    %v705 = vmul.f32 %v703, %v703
    %v706 = vmul.f32 %v704, %v704
    %v707 = vsel %vm65, %v705, 0.0
    %708 = vadd.xlane.f32.xlu0 %v707
    %v709 = vpop.xlane.xlu0 %708
    %v710 = vsel %vm65, %v706, 0.0
    %711 = vadd.xlane.f32.xlu0 %v710
    %v712 = vpop.xlane.xlu0 %711
    %v713 = vmul.f32 %v709, %v78
    %v714 = vmul.f32 %v712, %v78
    %v715 = vadd.f32 %v713, 1e-05
    %v716 = vadd.f32 %v714, 1e-05
    %v717 = vrsqrt.pop %v715
    %v718 = vmul.f32 %v717, %v715
    %v719 = vmul.f32 %v718, %v717
    %v720 = vmul.f32 0.5, %v719
    %v721 = vsub.f32 1.5, %v720
    %v722 = vmul.f32 %v717, %v721
    %vm723 = vweird.f32 %v715
    %vm724 = vweird.f32 %v717
    %vm725 = vmor %vm723, %vm724
    %v726 = vsel %vm725, %v717, %v722
    %v727 = vrsqrt.pop %v716
    %v728 = vmul.f32 %v727, %v716
    %v729 = vmul.f32 %v728, %v727
    %v730 = vmul.f32 0.5, %v729
    %v731 = vsub.f32 1.5, %v730
    %v732 = vmul.f32 %v727, %v731
    %vm733 = vweird.f32 %v716
    %vm734 = vweird.f32 %v727
    %vm735 = vmor %vm733, %vm734
    %v736 = vsel %vm735, %v727, %v732
    %v737 = vmul.f32 %v703, %v726
    %v738 = vmul.f32 %v704, %v736
    %v740 = vperm.slane %v692, 0
    %v742 = vmul.f32 %v737, %v740
    %v743 = vmul.f32 %v738, %v740
    %v745 = vperm.slane %v694, 0
    %v747 = vadd.f32 %v742, %v745
    %v748 = vadd.f32 %v743, %v745
    %v749 = vpack.c.bf16 %v748, %v747
    %s750 = scalar_lea.vmem %s3, 16
    %v751 = vld [vmem:[%s750] sm:$0xf]
    %v752 = vld [vmem:[%s750 + $0x4] sm:$0xf]
    %v753 = vld [vmem:[%s750 + $0x8] sm:$0xf]
    %v754 = vld [vmem:[%s750 + $0xc] sm:$0xf]
    %s755 = scalar_lea.vmem %s4, 1
    %v756 = vld [vmem:[%s755] sm:$0x1]
    %v758 = vperm.slane %v756, 0
    %v764 = vunpack.c.l.b16 %v751
    %v765 = vunpack.c.l.b16 %v752
    %v766 = vunpack.c.l.b16 %v753
    %v767 = vunpack.c.l.b16 %v754
    %v768 = vpack.c.b16 %v765, %v764
    %v769 = vpack.c.b16 %v767, %v766
    %v773 = vsel %vm65, %v749, 0
    %775 = vmatpush.bf16.msra.mxu0 0
    %776 = vmatpush.bf16.msra.mxu0 0
    %777 = vmatpush.bf16.msra.mxu0 0
    %778 = vmatpush.bf16.msra.mxu0 0
    %779 = vmatpush.bf16.msra.mxu0 0
    %780 = vmatpush.bf16.msra.mxu0 0
    %781 = vmatpush.bf16.msra.mxu0 %v769
    %782 = vmatpush.bf16.msra.mxu0 %v768
    %783 = vmatmul.bf16.gmra.mxu0 %v773
    %v784 = vpop.f32.mrf.mxu0
    %v785 = vadd.f32 %v758, %v784
    %v786 = vpop.f32.mrf.mxu0
    %v787 = vadd.f32 %v758, %v786
    %788 = vdwg.mxu0
    %s789 = scalar_lea.vmem %s5, 16
    %v790 = vld [vmem:[%s789] sm:$0xf]
    %v791 = vld [vmem:[%s789 + $0x4] sm:$0xf]
    %v792 = vld [vmem:[%s789 + $0x8] sm:$0xf]
    %v793 = vld [vmem:[%s789 + $0xc] sm:$0xf]
    %v794 = vpack.c.bf16 %v785, %v785
    %796 = vrot.lane.b32.xlu0 %v794, 96
    %v797 = vpop.permute.xlu0 %796
    %v799 = vsel %vm173, %v794, 0
    %v802 = vsel %vm173, %v797, 0
    %804 = vmatpush.bf16.xpose.msra.mxu0 0
    %805 = vmatpush.bf16.xpose.msra.mxu0 0
    %806 = vmatpush.bf16.xpose.msra.mxu0 0
    %807 = vmatpush.bf16.xpose.msra.mxu0 0
    %808 = vmatpush.bf16.xpose.msra.mxu0 0
    %809 = vmatpush.bf16.xpose.msra.mxu0 0
    %810 = vmatpush.bf16.xpose.msra.mxu0 0
    %811 = vmatpush.bf16.xpose.msra.mxu0 %v802
    %812 = vmatmul.bf16.gmra.mxu0 %v799
    %v813 = vpop.f32.mrf.mxu0
    %v814 = vadd.f32 0.0, %v813
    %v815 = vpop.f32.mrf.mxu0
    %816 = vdwg.mxu0
    %v817 = vmul.f32 %v814, 0.25
    %v818 = vadd.f32 %v817, %v62
    %v819 = vsel %vm195, %v818, -inf
    %820 = vmax.xlane.f32.xlu0 %v819
    %v821 = vpop.xlane.xlu0 %820
    %v822 = vsub.f32 %v818, %v821
    %v823 = vmul.f32 %v822, 1.442695
    %v824 = vpow.pop %v823
    %v825 = vsel %vm195, %v824, 0.0
    %826 = vadd.xlane.f32.xlu0 %v825
    %v827 = vpop.xlane.xlu0 %826
    %v828 = vrcp.pop %v827
    %v829 = vmul.f32 %v824, %v828
    %v830 = vpack.c.bf16 %v829, %v829
    %831 = vrot.lane.b32.xlu0 %v794, 64
    %v832 = vpop.permute.xlu0 %831
    %v834 = vsel %vm195, %v830, 0
    %v837 = vsel %vm213, %v832, 0
    %839 = vmatpush.bf16.msra.mxu0 0
    %840 = vmatpush.bf16.msra.mxu0 0
    %841 = vmatpush.bf16.msra.mxu0 0
    %842 = vmatpush.bf16.msra.mxu0 0
    %843 = vmatpush.bf16.msra.mxu0 0
    %844 = vmatpush.bf16.msra.mxu0 0
    %845 = vmatpush.bf16.msra.mxu0 0
    %846 = vmatpush.bf16.msra.mxu0 %v837
    %847 = vmatmul.bf16.gmra.mxu0 %v834
    %v848 = vpop.f32.mrf.mxu0
    %v849 = vadd.f32 0.0, %v848
    %v850 = vpop.f32.mrf.mxu0
    %851 = vdwg.mxu0
    %v852 = vpack.c.bf16 %v849, %v849
    %853 = vrot.lane.b32.xlu0 %v794, 112
    %v854 = vpop.permute.xlu0 %853
    %855 = vrot.lane.b32.xlu0 %v794, 80
    %v856 = vpop.permute.xlu0 %855
    %v858 = vsel %vm173, %v854, 0
    %v861 = vsel %vm173, %v856, 0
    %863 = vmatpush.bf16.xpose.msra.mxu0 0
    %864 = vmatpush.bf16.xpose.msra.mxu0 0
    %865 = vmatpush.bf16.xpose.msra.mxu0 0
    %866 = vmatpush.bf16.xpose.msra.mxu0 0
    %867 = vmatpush.bf16.xpose.msra.mxu0 0
    %868 = vmatpush.bf16.xpose.msra.mxu0 0
    %869 = vmatpush.bf16.xpose.msra.mxu0 0
    %870 = vmatpush.bf16.xpose.msra.mxu0 %v861
    %871 = vmatmul.bf16.gmra.mxu0 %v858
    %v872 = vpop.f32.mrf.mxu0
    %v873 = vadd.f32 0.0, %v872
    %v874 = vpop.f32.mrf.mxu0
    %875 = vdwg.mxu0
    %v876 = vmul.f32 %v873, 0.25
    %v877 = vadd.f32 %v876, %v62
    %v878 = vsel %vm195, %v877, -inf
    %879 = vmax.xlane.f32.xlu0 %v878
    %v880 = vpop.xlane.xlu0 %879
    %v881 = vsub.f32 %v877, %v880
    %v882 = vmul.f32 %v881, 1.442695
    %v883 = vpow.pop %v882
    %v884 = vsel %vm195, %v883, 0.0
    %885 = vadd.xlane.f32.xlu0 %v884
    %v886 = vpop.xlane.xlu0 %885
    %v887 = vrcp.pop %v886
    %v888 = vmul.f32 %v883, %v887
    %v889 = vpack.c.bf16 %v888, %v888
    %890 = vrot.lane.b32.xlu0 %v794, 48
    %v891 = vpop.permute.xlu0 %890
    %v893 = vsel %vm195, %v889, 0
    %v896 = vsel %vm213, %v891, 0
    %898 = vmatpush.bf16.msra.mxu0 0
    %899 = vmatpush.bf16.msra.mxu0 0
    %900 = vmatpush.bf16.msra.mxu0 0
    %901 = vmatpush.bf16.msra.mxu0 0
    %902 = vmatpush.bf16.msra.mxu0 0
    %903 = vmatpush.bf16.msra.mxu0 0
    %904 = vmatpush.bf16.msra.mxu0 0
    %905 = vmatpush.bf16.msra.mxu0 %v896
    %906 = vmatmul.bf16.gmra.mxu0 %v893
    %v907 = vpop.f32.mrf.mxu0
    %v908 = vadd.f32 0.0, %v907
    %v909 = vpop.f32.mrf.mxu0
    %910 = vdwg.mxu0
    %v911 = vpack.c.bf16 %v908, %v908
    %v914 = vunpack.c.l.b16 %v792
    %v915 = vunpack.c.l.b16 %v793
    %v916 = vpack.c.b16 %v915, %v914
    %v919 = vsel %vm173, %v911, 0
    %921 = vmatpush.bf16.msra.mxu0 0
    %922 = vmatpush.bf16.msra.mxu0 0
    %923 = vmatpush.bf16.msra.mxu0 0
    %924 = vmatpush.bf16.msra.mxu0 0
    %925 = vmatpush.bf16.msra.mxu0 0
    %926 = vmatpush.bf16.msra.mxu0 0
    %927 = vmatpush.bf16.msra.mxu0 0
    %928 = vmatpush.bf16.msra.mxu0 %v916
    %929 = vmatmul.bf16.gmra.mxu0 %v919
    %v930 = vpop.f32.mrf.mxu0
    %v931 = vadd.f32 0.0, %v930
    %v932 = vpop.f32.mrf.mxu0
    %933 = vdwg.mxu0
    %v936 = vunpack.c.l.b16 %v790
    %v937 = vunpack.c.l.b16 %v791
    %v938 = vpack.c.b16 %v937, %v936
    %v941 = vsel %vm173, %v852, 0
    %943 = vmatpush.bf16.msra.mxu0 0
    %944 = vmatpush.bf16.msra.mxu0 0
    %945 = vmatpush.bf16.msra.mxu0 0
    %946 = vmatpush.bf16.msra.mxu0 0
    %947 = vmatpush.bf16.msra.mxu0 0
    %948 = vmatpush.bf16.msra.mxu0 0
    %949 = vmatpush.bf16.msra.mxu0 0
    %950 = vmatpush.bf16.msra.mxu0 %v938
    %951 = vmatmul.bf16.gmra.mxu0 %v941
    %v952 = vpop.f32.mrf.mxu0
    %v953 = vadd.f32 %v931, %v952
    %v954 = vpop.f32.mrf.mxu0
    %955 = vdwg.mxu0
    %v956 = vpack.c.bf16 %v787, %v787
    %958 = vrot.lane.b32.xlu0 %v956, 96
    %v959 = vpop.permute.xlu0 %958
    %v961 = vsel %vm173, %v956, 0
    %v964 = vsel %vm173, %v959, 0
    %966 = vmatpush.bf16.xpose.msra.mxu0 0
    %967 = vmatpush.bf16.xpose.msra.mxu0 0
    %968 = vmatpush.bf16.xpose.msra.mxu0 0
    %969 = vmatpush.bf16.xpose.msra.mxu0 0
    %970 = vmatpush.bf16.xpose.msra.mxu0 0
    %971 = vmatpush.bf16.xpose.msra.mxu0 0
    %972 = vmatpush.bf16.xpose.msra.mxu0 0
    %973 = vmatpush.bf16.xpose.msra.mxu0 %v964
    %974 = vmatmul.bf16.gmra.mxu0 %v961
    %v975 = vpop.f32.mrf.mxu0
    %v976 = vadd.f32 0.0, %v975
    %v977 = vpop.f32.mrf.mxu0
    %978 = vdwg.mxu0
    %v979 = vmul.f32 %v976, 0.25
    %v980 = vadd.f32 %v979, %v62
    %v981 = vsel %vm195, %v980, -inf
    %982 = vmax.xlane.f32.xlu0 %v981
    %v983 = vpop.xlane.xlu0 %982
    %v984 = vsub.f32 %v980, %v983
    %v985 = vmul.f32 %v984, 1.442695
    %v986 = vpow.pop %v985
    %v987 = vsel %vm195, %v986, 0.0
    %988 = vadd.xlane.f32.xlu0 %v987
    %v989 = vpop.xlane.xlu0 %988
    %v990 = vrcp.pop %v989
    %v991 = vmul.f32 %v986, %v990
    %v992 = vpack.c.bf16 %v991, %v991
    %993 = vrot.lane.b32.xlu0 %v956, 64
    %v994 = vpop.permute.xlu0 %993
    %v996 = vsel %vm195, %v992, 0
    %v999 = vsel %vm213, %v994, 0
    %1001 = vmatpush.bf16.msra.mxu0 0
    %1002 = vmatpush.bf16.msra.mxu0 0
    %1003 = vmatpush.bf16.msra.mxu0 0
    %1004 = vmatpush.bf16.msra.mxu0 0
    %1005 = vmatpush.bf16.msra.mxu0 0
    %1006 = vmatpush.bf16.msra.mxu0 0
    %1007 = vmatpush.bf16.msra.mxu0 0
    %1008 = vmatpush.bf16.msra.mxu0 %v999
    %1009 = vmatmul.bf16.gmra.mxu0 %v996
    %v1010 = vpop.f32.mrf.mxu0
    %v1011 = vadd.f32 0.0, %v1010
    %v1012 = vpop.f32.mrf.mxu0
    %1013 = vdwg.mxu0
    %v1014 = vpack.c.bf16 %v1011, %v1011
    %1015 = vrot.lane.b32.xlu0 %v956, 112
    %v1016 = vpop.permute.xlu0 %1015
    %1017 = vrot.lane.b32.xlu0 %v956, 80
    %v1018 = vpop.permute.xlu0 %1017
    %v1020 = vsel %vm173, %v1016, 0
    %v1023 = vsel %vm173, %v1018, 0
    %1025 = vmatpush.bf16.xpose.msra.mxu0 0
    %1026 = vmatpush.bf16.xpose.msra.mxu0 0
    %1027 = vmatpush.bf16.xpose.msra.mxu0 0
    %1028 = vmatpush.bf16.xpose.msra.mxu0 0
    %1029 = vmatpush.bf16.xpose.msra.mxu0 0
    %1030 = vmatpush.bf16.xpose.msra.mxu0 0
    %1031 = vmatpush.bf16.xpose.msra.mxu0 0
    %1032 = vmatpush.bf16.xpose.msra.mxu0 %v1023
    %1033 = vmatmul.bf16.gmra.mxu0 %v1020
    %v1034 = vpop.f32.mrf.mxu0
    %v1035 = vadd.f32 0.0, %v1034
    %v1036 = vpop.f32.mrf.mxu0
    %1037 = vdwg.mxu0
    %v1038 = vmul.f32 %v1035, 0.25
    %v1039 = vadd.f32 %v1038, %v62
    %v1040 = vsel %vm195, %v1039, -inf
    %1041 = vmax.xlane.f32.xlu0 %v1040
    %v1042 = vpop.xlane.xlu0 %1041
    %v1043 = vsub.f32 %v1039, %v1042
    %v1044 = vmul.f32 %v1043, 1.442695
    %v1045 = vpow.pop %v1044
    %v1046 = vsel %vm195, %v1045, 0.0
    %1047 = vadd.xlane.f32.xlu0 %v1046
    %v1048 = vpop.xlane.xlu0 %1047
    %v1049 = vrcp.pop %v1048
    %v1050 = vmul.f32 %v1045, %v1049
    %v1051 = vpack.c.bf16 %v1050, %v1050
    %1052 = vrot.lane.b32.xlu0 %v956, 48
    %v1053 = vpop.permute.xlu0 %1052
    %v1055 = vsel %vm195, %v1051, 0
    %v1058 = vsel %vm213, %v1053, 0
    %1060 = vmatpush.bf16.msra.mxu0 0
    %1061 = vmatpush.bf16.msra.mxu0 0
    %1062 = vmatpush.bf16.msra.mxu0 0
    %1063 = vmatpush.bf16.msra.mxu0 0
    %1064 = vmatpush.bf16.msra.mxu0 0
    %1065 = vmatpush.bf16.msra.mxu0 0
    %1066 = vmatpush.bf16.msra.mxu0 0
    %1067 = vmatpush.bf16.msra.mxu0 %v1058
    %1068 = vmatmul.bf16.gmra.mxu0 %v1055
    %v1069 = vpop.f32.mrf.mxu0
    %v1070 = vadd.f32 0.0, %v1069
    %v1071 = vpop.f32.mrf.mxu0
    %1072 = vdwg.mxu0
    %v1073 = vpack.c.bf16 %v1070, %v1070
    %v1075 = vsel %vm173, %v1073, 0
    %1077 = vmatpush.bf16.msra.mxu0 0
    %1078 = vmatpush.bf16.msra.mxu0 0
    %1079 = vmatpush.bf16.msra.mxu0 0
    %1080 = vmatpush.bf16.msra.mxu0 0
    %1081 = vmatpush.bf16.msra.mxu0 0
    %1082 = vmatpush.bf16.msra.mxu0 0
    %1083 = vmatpush.bf16.msra.mxu0 0
    %1084 = vmatpush.bf16.msra.mxu0 %v916
    %1085 = vmatmul.bf16.gmra.mxu0 %v1075
    %v1086 = vpop.f32.mrf.mxu0
    %v1087 = vadd.f32 0.0, %v1086
    %v1088 = vpop.f32.mrf.mxu0
    %1089 = vdwg.mxu0
    %v1091 = vsel %vm173, %v1014, 0
    %1093 = vmatpush.bf16.msra.mxu0 0
    %1094 = vmatpush.bf16.msra.mxu0 0
    %1095 = vmatpush.bf16.msra.mxu0 0
    %1096 = vmatpush.bf16.msra.mxu0 0
    %1097 = vmatpush.bf16.msra.mxu0 0
    %1098 = vmatpush.bf16.msra.mxu0 0
    %1099 = vmatpush.bf16.msra.mxu0 0
    %1100 = vmatpush.bf16.msra.mxu0 %v938
    %1101 = vmatmul.bf16.gmra.mxu0 %v1091
    %v1102 = vpop.f32.mrf.mxu0
    %v1103 = vadd.f32 %v1087, %v1102
    %v1104 = vpop.f32.mrf.mxu0
    %1105 = vdwg.mxu0
    %s1106 = scalar_lea.vmem %s6, 1
    %v1107 = vld [vmem:[%s1106] sm:$0x1]
    %v1109 = vperm.slane %v1107, 0
    %v1111 = vadd.f32 %v953, %v1109
    %v1112 = vadd.f32 %v1103, %v1109
    %v1113 = vadd.f32 %v689, %v1111
    %v1114 = vadd.f32 %v690, %v1112
    %s1115 = scalar_lea.vmem %s7, 1
    %v1116 = vld [vmem:[%s1115] sm:$0x1]
    %s1117 = scalar_lea.vmem %s8, 1
    %v1118 = vld [vmem:[%s1117] sm:$0x1]
    %v1119 = vsel %vm65, %v1113, 0.0
    %1120 = vadd.xlane.f32.xlu0 %v1119
    %v1121 = vpop.xlane.xlu0 %1120
    %v1122 = vsel %vm65, %v1114, 0.0
    %1123 = vadd.xlane.f32.xlu0 %v1122
    %v1124 = vpop.xlane.xlu0 %1123
    %v1125 = vmul.f32 %v1121, %v78
    %v1126 = vmul.f32 %v1124, %v78
    %v1127 = vsub.f32 %v1113, %v1125
    %v1128 = vsub.f32 %v1114, %v1126
    %v1129 = vmul.f32 %v1127, %v1127
    %v1130 = vmul.f32 %v1128, %v1128
    %v1131 = vsel %vm65, %v1129, 0.0
    %1132 = vadd.xlane.f32.xlu0 %v1131
    %v1133 = vpop.xlane.xlu0 %1132
    %v1134 = vsel %vm65, %v1130, 0.0
    %1135 = vadd.xlane.f32.xlu0 %v1134
    %v1136 = vpop.xlane.xlu0 %1135
    %v1137 = vmul.f32 %v1133, %v78
    %v1138 = vmul.f32 %v1136, %v78
    %v1139 = vadd.f32 %v1137, 1e-05
    %v1140 = vadd.f32 %v1138, 1e-05
    %v1141 = vrsqrt.pop %v1139
    %v1142 = vmul.f32 %v1141, %v1139
    %v1143 = vmul.f32 %v1142, %v1141
    %v1144 = vmul.f32 0.5, %v1143
    %v1145 = vsub.f32 1.5, %v1144
    %v1146 = vmul.f32 %v1141, %v1145
    %vm1147 = vweird.f32 %v1139
    %vm1148 = vweird.f32 %v1141
    %vm1149 = vmor %vm1147, %vm1148
    %v1150 = vsel %vm1149, %v1141, %v1146
    %v1151 = vrsqrt.pop %v1140
    %v1152 = vmul.f32 %v1151, %v1140
    %v1153 = vmul.f32 %v1152, %v1151
    %v1154 = vmul.f32 0.5, %v1153
    %v1155 = vsub.f32 1.5, %v1154
    %v1156 = vmul.f32 %v1151, %v1155
    %vm1157 = vweird.f32 %v1140
    %vm1158 = vweird.f32 %v1151
    %vm1159 = vmor %vm1157, %vm1158
    %v1160 = vsel %vm1159, %v1151, %v1156
    %v1161 = vmul.f32 %v1127, %v1150
    %v1162 = vmul.f32 %v1128, %v1160
    %v1164 = vperm.slane %v1116, 0
    %v1166 = vmul.f32 %v1161, %v1164
    %v1167 = vmul.f32 %v1162, %v1164
    %v1169 = vperm.slane %v1118, 0
    %v1171 = vadd.f32 %v1166, %v1169
    %v1172 = vadd.f32 %v1167, %v1169
    %v1173 = vpack.c.bf16 %v1172, %v1171
    %s1174 = scalar_lea.vmem %s9, 16
    %v1175 = vld [vmem:[%s1174] sm:$0xf]
    %v1176 = vld [vmem:[%s1174 + $0x4] sm:$0xf]
    %v1177 = vld [vmem:[%s1174 + $0x8] sm:$0xf]
    %v1178 = vld [vmem:[%s1174 + $0xc] sm:$0xf]
    %s1179 = scalar_lea.vmem %s10, 1
    %v1180 = vld [vmem:[%s1179] sm:$0x1]
    %v1182 = vperm.slane %v1180, 0
    %v1188 = vunpack.c.l.b16 %v1175
    %v1189 = vunpack.c.l.b16 %v1176
    %v1190 = vunpack.c.l.b16 %v1177
    %v1191 = vunpack.c.l.b16 %v1178
    %v1192 = vpack.c.b16 %v1189, %v1188
    %v1193 = vpack.c.b16 %v1191, %v1190
    %v1197 = vsel %vm65, %v1173, 0
    %1199 = vmatpush.bf16.msra.mxu0 0
    %1200 = vmatpush.bf16.msra.mxu0 0
    %1201 = vmatpush.bf16.msra.mxu0 0
    %1202 = vmatpush.bf16.msra.mxu0 0
    %1203 = vmatpush.bf16.msra.mxu0 0
    %1204 = vmatpush.bf16.msra.mxu0 0
    %1205 = vmatpush.bf16.msra.mxu0 %v1193
    %1206 = vmatpush.bf16.msra.mxu0 %v1192
    %1207 = vmatmul.bf16.gmra.mxu0 %v1197
    %v1208 = vpop.f32.mrf.mxu0
    %v1209 = vadd.f32 %v1182, %v1208
    %v1210 = vpop.f32.mrf.mxu0
    %v1211 = vadd.f32 %v1182, %v1210
    %1212 = vdwg.mxu0
    %v1213 = vmul.f32 %v1209, 0.5
    %v1214 = vmul.f32 %v1211, 0.5
    %v1215 = vmul.f32 %v1209, 0.044715
    %v1216 = vmul.f32 %v1211, 0.044715
    %v1217 = vmul.f32 %v1215, %v1209
    %v1218 = vmul.f32 %v1216, %v1211
    %v1219 = vmul.f32 %v1217, %v1209
    %v1220 = vmul.f32 %v1218, %v1211
    %v1221 = vadd.f32 %v1209, %v1219
    %v1222 = vadd.f32 %v1211, %v1220
    %v1223 = vmul.f32 %v1221, 0.7978846
    %v1224 = vmul.f32 %v1222, 0.7978846
    %v1225 = vtanh.pop %v1223
    %v1226 = vtanh.pop %v1224
    %v1227 = vadd.f32 %v1225, 1.0
    %v1228 = vadd.f32 %v1226, 1.0
    %v1229 = vmul.f32 %v1213, %v1227
    %v1230 = vmul.f32 %v1214, %v1228
    %v1231 = vpack.c.bf16 %v1230, %v1229
    %s1232 = scalar_lea.vmem %s11, 64
    %v1233 = vld [vmem:[%s1232] sm:$0xf]
    %v1234 = vld [vmem:[%s1232 + $0x4] sm:$0xf]
    %v1235 = vld [vmem:[%s1232 + $0x8] sm:$0xf]
    %v1236 = vld [vmem:[%s1232 + $0xc] sm:$0xf]
    %v1237 = vld [vmem:[%s1232 + $0x10] sm:$0xf]
    %v1238 = vld [vmem:[%s1232 + $0x14] sm:$0xf]
    %v1239 = vld [vmem:[%s1232 + $0x18] sm:$0xf]
    %v1240 = vld [vmem:[%s1232 + $0x1c] sm:$0xf]
    %v1241 = vld [vmem:[%s1232 + $0x20] sm:$0xf]
    %v1242 = vld [vmem:[%s1232 + $0x24] sm:$0xf]
    %v1243 = vld [vmem:[%s1232 + $0x28] sm:$0xf]
    %v1244 = vld [vmem:[%s1232 + $0x2c] sm:$0xf]
    %v1245 = vld [vmem:[%s1232 + $0x30] sm:$0xf]
    %v1246 = vld [vmem:[%s1232 + $0x34] sm:$0xf]
    %v1247 = vld [vmem:[%s1232 + $0x38] sm:$0xf]
    %v1248 = vld [vmem:[%s1232 + $0x3c] sm:$0xf]
    %v1265 = vunpack.c.l.b16 %v1233
    %v1266 = vunpack.c.l.b16 %v1234
    %v1267 = vunpack.c.l.b16 %v1235
    %v1268 = vunpack.c.l.b16 %v1236
    %v1269 = vunpack.c.l.b16 %v1237
    %v1270 = vunpack.c.l.b16 %v1238
    %v1271 = vunpack.c.l.b16 %v1239
    %v1272 = vunpack.c.l.b16 %v1240
    %v1273 = vunpack.c.l.b16 %v1241
    %v1274 = vunpack.c.l.b16 %v1242
    %v1275 = vunpack.c.l.b16 %v1243
    %v1276 = vunpack.c.l.b16 %v1244
    %v1277 = vunpack.c.l.b16 %v1245
    %v1278 = vunpack.c.l.b16 %v1246
    %v1279 = vunpack.c.l.b16 %v1247
    %v1280 = vunpack.c.l.b16 %v1248
    %v1281 = vpack.c.b16 %v1266, %v1265
    %v1282 = vpack.c.b16 %v1268, %v1267
    %v1283 = vpack.c.b16 %v1270, %v1269
    %v1284 = vpack.c.b16 %v1272, %v1271
    %v1285 = vpack.c.b16 %v1274, %v1273
    %v1286 = vpack.c.b16 %v1276, %v1275
    %v1287 = vpack.c.b16 %v1278, %v1277
    %v1288 = vpack.c.b16 %v1280, %v1279
    %1297 = vmatpush.bf16.msra.mxu0 %v1288
    %1298 = vmatpush.bf16.msra.mxu0 %v1287
    %1299 = vmatpush.bf16.msra.mxu0 %v1286
    %1300 = vmatpush.bf16.msra.mxu0 %v1285
    %1301 = vmatpush.bf16.msra.mxu0 %v1284
    %1302 = vmatpush.bf16.msra.mxu0 %v1283
    %1303 = vmatpush.bf16.msra.mxu0 %v1282
    %1304 = vmatpush.bf16.msra.mxu0 %v1281
    %1305 = vmatmul.bf16.gmra.mxu0 %v1231
    %v1306 = vpop.f32.mrf.mxu0
    %v1307 = vadd.f32 0.0, %v1306
    %v1308 = vpop.f32.mrf.mxu0
    %v1309 = vadd.f32 0.0, %v1308
    %1310 = vdwg.mxu0
    %v1311 = vadd.f32 %v1113, %v1307
    %v1312 = vadd.f32 %v1114, %v1309
    %s1313 = scalar_lea.vmem %s12, 1
    %v1314 = vld [vmem:[%s1313] sm:$0x1]
    %v1316 = vperm.slane %v1314, 0
    %v1318 = vadd.f32 %v1311, %v1316
    %v1319 = vadd.f32 %v1312, %v1316
    %v1320 = vld [vmem:[%s13] sm:$0x1]
    %v1321 = vld [vmem:[%s14] sm:$0x1]
    %v1322 = vsel %vm65, %v1318, 0.0
    %1323 = vadd.xlane.f32.xlu0 %v1322
    %v1324 = vpop.xlane.xlu0 %1323
    %v1325 = vsel %vm65, %v1319, 0.0
    %1326 = vadd.xlane.f32.xlu0 %v1325
    %v1327 = vpop.xlane.xlu0 %1326
    %v1328 = vmul.f32 %v1324, %v78
    %v1329 = vmul.f32 %v1327, %v78
    %v1330 = vsub.f32 %v1318, %v1328
    %v1331 = vsub.f32 %v1319, %v1329
    %v1332 = vmul.f32 %v1330, %v1330
    %v1333 = vmul.f32 %v1331, %v1331
    %v1334 = vsel %vm65, %v1332, 0.0
    %1335 = vadd.xlane.f32.xlu0 %v1334
    %v1336 = vpop.xlane.xlu0 %1335
    %v1337 = vsel %vm65, %v1333, 0.0
    %1338 = vadd.xlane.f32.xlu0 %v1337
    %v1339 = vpop.xlane.xlu0 %1338
    %v1340 = vmul.f32 %v1336, %v78
    %v1341 = vmul.f32 %v1339, %v78
    %v1342 = vadd.f32 %v1340, 1e-05
    %v1343 = vadd.f32 %v1341, 1e-05
    %v1344 = vrsqrt.pop %v1342
    %v1345 = vmul.f32 %v1344, %v1342
    %v1346 = vmul.f32 %v1345, %v1344
    %v1347 = vmul.f32 0.5, %v1346
    %v1348 = vsub.f32 1.5, %v1347
    %v1349 = vmul.f32 %v1344, %v1348
    %vm1350 = vweird.f32 %v1342
    %vm1351 = vweird.f32 %v1344
    %vm1352 = vmor %vm1350, %vm1351
    %v1353 = vsel %vm1352, %v1344, %v1349
    %v1354 = vrsqrt.pop %v1343
    %v1355 = vmul.f32 %v1354, %v1343
    %v1356 = vmul.f32 %v1355, %v1354
    %v1357 = vmul.f32 0.5, %v1356
    %v1358 = vsub.f32 1.5, %v1357
    %v1359 = vmul.f32 %v1354, %v1358
    %vm1360 = vweird.f32 %v1343
    %vm1361 = vweird.f32 %v1354
    %vm1362 = vmor %vm1360, %vm1361
    %v1363 = vsel %vm1362, %v1354, %v1359
    %v1364 = vmul.f32 %v1330, %v1353
    %v1365 = vmul.f32 %v1331, %v1363
    %v1367 = vperm.slane %v1320, 0
    %v1369 = vmul.f32 %v1364, %v1367
    %v1370 = vmul.f32 %v1365, %v1367
    %v1372 = vperm.slane %v1321, 0
    %v1374 = vadd.f32 %v1369, %v1372
    %v1375 = vadd.f32 %v1370, %v1372
    %v1376 = vpack.c.bf16 %v1375, %v1374
    %v1377 = vld [vmem:[%s15] sm:$0xff]
    %v1378 = vld [vmem:[%s15 + $0x8] sm:$0xff]
    %v1379 = vld [vmem:[%s15 + $0x10] sm:$0xff]
    %v1380 = vld [vmem:[%s15 + $0x18] sm:$0xff]
    %v1385 = vunpack.c.l.b16 %v1377
    %v1386 = vunpack.c.h.b16 %v1377
    %v1387 = vunpack.c.l.b16 %v1378
    %v1388 = vunpack.c.h.b16 %v1378
    %v1389 = vunpack.c.l.b16 %v1379
    %v1390 = vunpack.c.h.b16 %v1379
    %v1391 = vunpack.c.l.b16 %v1380
    %v1392 = vunpack.c.h.b16 %v1380
    %v1393 = vpack.c.b16 %v1387, %v1385
    %v1394 = vpack.c.b16 %v1388, %v1386
    %v1395 = vpack.c.b16 %v1391, %v1389
    %v1396 = vpack.c.b16 %v1392, %v1390
    %v1402 = vsel %vm65, %v1376, 0
    %1404 = vmatpush.bf16.msra.mxu0 0
    %1405 = vmatpush.bf16.msra.mxu0 0
    %1406 = vmatpush.bf16.msra.mxu0 0
    %1407 = vmatpush.bf16.msra.mxu0 0
    %1408 = vmatpush.bf16.msra.mxu0 0
    %1409 = vmatpush.bf16.msra.mxu0 0
    %1410 = vmatpush.bf16.msra.mxu0 %v1395
    %1411 = vmatpush.bf16.msra.mxu0 %v1393
    %1412 = vmatmul.bf16.gmra.mxu0 %v1402
    %v1413 = vpop.f32.mrf.mxu0
    %v1414 = vadd.f32 0.0, %v1413
    %v1415 = vpop.f32.mrf.mxu0
    %v1416 = vadd.f32 0.0, %v1415
    %1417 = vdwg.mxu0
    %1418 = vmatpush.bf16.msra.mxu0 0
    %1419 = vmatpush.bf16.msra.mxu0 0
    %1420 = vmatpush.bf16.msra.mxu0 0
    %1421 = vmatpush.bf16.msra.mxu0 0
    %1422 = vmatpush.bf16.msra.mxu0 0
    %1423 = vmatpush.bf16.msra.mxu0 0
    %1424 = vmatpush.bf16.msra.mxu0 %v1396
    %1425 = vmatpush.bf16.msra.mxu0 %v1394
    %1426 = vmatmul.bf16.gmra.mxu0 %v1402
    %v1427 = vpop.f32.mrf.mxu0
    %v1428 = vadd.f32 0.0, %v1427
    %v1429 = vpop.f32.mrf.mxu0
    %v1430 = vadd.f32 0.0, %v1429
    %1431 = vdwg.mxu0
    %1432 = vst [vmem:[#allocation2] sm:$0xff] %v1414
    %1433 = vst [vmem:[#allocation2 + $0x8] sm:$0xff] %v1428
    %1434 = vst [vmem:[#allocation2 + $0x10] sm:$0xff] %v1416
    %1435 = vst [vmem:[#allocation2 + $0x18] sm:$0xff] %v1430
    // Predicated region
    $region66: #{gpt_forward.1} parent=1 // pred_check
      _
    $region67: #{gpt_forward.1} parent=1 // pred_check_branch
      %1437 = sbr.rel (0) target = $region69
    $region68: #{gpt_forward.1} parent=1 // pred_region
      %1439 = vsyncadd [#allocation3], 0
      %s1440 = sshll.u32 [#allocation2], 4
      %s1441 = int_to_ptr.vmem [resolvable:$true] %s1440
      %s1442 = sshll.u32 %s16, 4
      %s1443 = int_to_ptr.hbm [resolvable:$true] %s1442
      %1448 = dma.vmem_to_hbm [thread:$0]  %s1441, 512, %s1443, [#allocation3], 256, 256, 16
    $region69: #{gpt_forward.1} parent=1 // pred_fallthru
      _
    // Predicated region
    $region70: #{gpt_forward.1} parent=1 // pred_check
      _
    $region71: #{gpt_forward.1} parent=1 // pred_check_branch
      %1450 = sbr.rel (0) target = $region73
    $region72: #{gpt_forward.1} parent=1 // pred_region
      %1452 = dma.done [#allocation3], 512
    $region73: #{gpt_forward.1} parent=1 // pred_fallthru
      _
    %1453 = vsyncpa [#allocation3], 1

</llo_original>
